<compile_context>
chip_gen: v7x
topology: tpu7x:2x2x1
jax: 0.10.0
libtpu: 0.0.40
codegen_flags: <defaults>
</compile_context>

<pallas_src>
import functools
import math

import jax
import jax.numpy as jnp
import numpy as np
from jax import lax
from jax.experimental import pallas as pl
from jax.experimental.pallas import tpu as pltpu

EPS = 1.1920929e-07  # torch.finfo(torch.float32).eps  (F.rms_norm default)


def _rms_norm(x, eps=EPS):
    return x * lax.rsqrt(jnp.mean(x * x, axis=-1, keepdims=True) + eps)


def _pick_tile(total, target=256):
    """Largest divisor of `total` that is <= target and a multiple of 8."""
    if total <= target:
        return total
    t = target
    while t > 8:
        if total % t == 0:
            return t
        t -= 8
    return total


def _pick_hidden_chunk(hidden, target=1024):
    if hidden <= target:
        return hidden
    c = target
    while c >= 128:
        if hidden % c == 0:
            return c
        c -= 128
    return hidden


def _vmem_limit_bytes():
    # Never request the full physical VMEM (64 MiB/TC on v7x); leave headroom
    # for compiler-internal scratch and the pipelined I/O buffers.
    cap = 128 * 1024 * 1024
    try:
        cap = int(pltpu.get_tpu_info().vmem_capacity_bytes)
    except Exception:
        pass
    return int(min(cap - 16 * 1024 * 1024, 96 * 1024 * 1024))


def _rotary_tables(T, head_dim):
    """Full-width RoPE tables: cos_full=[cos,cos], sin_full=[sin,-sin].
    Built with numpy so they become trace-time constants (no extra XLA ops);
    values are bf16-rounded to match the torch Rotary cache."""
    d2 = head_dim // 2
    inv_freq = 1.0 / (10000.0 ** (np.arange(0, head_dim, 2, dtype=np.float32)
                                  / head_dim))
    freqs = np.outer(np.arange(T, dtype=np.float32), inv_freq)      # (T, d2)
    cos = np.cos(freqs).astype(jnp.bfloat16).astype(np.float32)
    sin = np.sin(freqs).astype(jnp.bfloat16).astype(np.float32)
    cos_f = np.concatenate([cos, cos], axis=1)                       # (T, D)
    sin_f = np.concatenate([sin, -sin], axis=1)                      # (T, D)
    return jnp.asarray(cos_f), jnp.asarray(sin_f)


# ----------------------------------------------------------------------------
# One-time weight packing (NOT per forward call).
# ----------------------------------------------------------------------------
def prepare_block_weights(weights, n_head):
    wq, wk, wv, wo, wfc, wpr, lambdas, lamb = weights
    C = wq.shape[0]
    hidden = wfc.shape[1]
    hk = _pick_hidden_chunk(hidden)
    n_hc = hidden // hk

    w_qkv = jnp.concatenate([wq, wk, wv], axis=1).astype(jnp.bfloat16)  # (C,3C)
    wo_b = wo.astype(jnp.bfloat16)                                      # (C,C)
    wfc_c = (wfc.reshape(C, n_hc, hk).transpose(1, 0, 2)
             .astype(jnp.bfloat16))                                     # (n,C,hk)
    wpr_c = wpr.reshape(n_hc, hk, C).astype(jnp.bfloat16)               # (n,hk,C)
    params = jnp.concatenate([lambdas.astype(jnp.float32).reshape(2),
                              jnp.asarray(lamb, jnp.float32).reshape(1)])
    return dict(w_qkv=w_qkv, wo=wo_b, wfc=wfc_c, wpr=wpr_c, params=params,
                n_head=n_head, n_embd=C, hidden_chunk=hk,
                n_hidden_chunks=n_hc)


# ----------------------------------------------------------------------------
# Kernel 1: fused QKV projection + per-head RMS norm + RoPE + value mixing.
# ----------------------------------------------------------------------------
def _qkv_rope_body(params_ref, x_ref, x0_ref, v1_packed, wqkv_ref,
                   cosf_ref, sinf_ref, q_out_ref, k_out_ref, vmix_out_ref,
                   *, n_head, head_dim):
    l0 = params_ref[0]
    l1 = params_ref[1]
    lamb = params_ref[2]
    H, D = n_head, head_dim
    d2 = D // 2

    x = l0 * x_ref[0] + l1 * x0_ref[0]                 # (Tq, C) f32 residual mix
    C = x.shape[-1]
    xn = _rms_norm(x).astype(jnp.bfloat16)

    # single lane-dense QKV matmul, f32 accumulation
    qkv = jnp.dot(xn, wqkv_ref[...], preferred_element_type=jnp.float32)
    q = qkv[:, :C]
    k = qkv[:, C:2 * C]
    v = qkv[:, 2 * C:]

    v1 = v if v1_packed is None else v1_packed
    v_mix = (1.0 - lamb) * v + lamb * v1               # packed (Tq, C) f32

    def split_heads(z):                                 # (Tq, C) -> (H, Tq, D)
        return jnp.stack([z[:, h * D:(h + 1) * D] for h in range(H)], axis=0)

    qh = _rms_norm(split_heads(q))                      # per-head RMS norm (f32)
    kh = _rms_norm(split_heads(k))

    cosf = cosf_ref[...][None]                          # (1, Tq, D)
    sinf = sinf_ref[...][None]

    def rope(z):
        # full-width rotate-half: y = z*[cos,cos] + rot_half(z)*[sin,-sin]
        # TODO(synk): pltpu.roll(z, d2, axis=2) would move this onto the XLU.
        zr = jnp.concatenate([z[..., d2:], z[..., :d2]], axis=-1)
        return z * cosf + zr * sinf

    q_out_ref[0] = rope(qh).astype(jnp.bfloat16)
    k_out_ref[0] = rope(kh).astype(jnp.bfloat16)
    vmix_out_ref[0] = split_heads(v_mix).astype(jnp.bfloat16)
    return v


def _qkv_kernel_with_v1(params_ref, x_ref, x0_ref, v1_ref, wqkv_ref,
                        cosf_ref, sinf_ref, q_out_ref, k_out_ref, vmix_out_ref,
                        *, n_head, head_dim):
    _qkv_rope_body(params_ref, x_ref, x0_ref, v1_ref[0], wqkv_ref,
                   cosf_ref, sinf_ref, q_out_ref, k_out_ref, vmix_out_ref,
                   n_head=n_head, head_dim=head_dim)


def _qkv_kernel_no_v1(params_ref, x_ref, x0_ref, wqkv_ref, cosf_ref, sinf_ref,
                      q_out_ref, k_out_ref, vmix_out_ref, v1_out_ref,
                      *, n_head, head_dim):
    v = _qkv_rope_body(params_ref, x_ref, x0_ref, None, wqkv_ref,
                       cosf_ref, sinf_ref, q_out_ref, k_out_ref, vmix_out_ref,
                       n_head=n_head, head_dim=head_dim)
    v1_out_ref[0] = v                                   # packed (Tq, C) f32


# ----------------------------------------------------------------------------
# Kernel 2: flash attention (causal, online softmax) + output proj + MLP.
# ----------------------------------------------------------------------------
def _attn_mlp_kernel(params_ref, x_ref, x0_ref, q_ref, k_ref, v_ref,
                     wo_ref, wfc_ref, wpr_ref, x_out_ref,
                     *, n_head, head_dim, tq, tk, n_hidden_chunks):
    H, D, Tq, Tk = n_head, head_dim, tq, tk
    l0 = params_ref[0]
    l1 = params_ref[1]
    qi = pl.program_id(1)
    scale = 1.0 / math.sqrt(D)

    x = l0 * x_ref[0] + l1 * x0_ref[0]                  # (Tq, C) mixed residual
    q = q_ref[0]                                        # (H, Tq, D) bf16

    row = lax.broadcasted_iota(jnp.int32, (Tq, Tk), 0)
    col = lax.broadcasted_iota(jnp.int32, (Tq, Tk), 1)
    q_pos = qi * Tq + row

    def kv_step(j, carry):
        m, l, acc = carry
        t0 = pl.multiple_of(j * Tk, Tk)
        k = k_ref[0, :, pl.ds(t0, Tk), :]               # (H, Tk, D) bf16
        v = v_ref[0, :, pl.ds(t0, Tk), :]
        s = jnp.einsum('hqd,hkd->hqk', q, k,
                       preferred_element_type=jnp.float32) * scale
        mask = q_pos >= (t0 + col)                      # causal, f32 scores
        s = jnp.where(mask[None], s, jnp.float32(-1e30))
        m_new = jnp.maximum(m, jnp.max(s, axis=-1, keepdims=True))
        alpha = jnp.exp(m - m_new)
        p = jnp.exp(s - m_new)
        l_new = alpha * l + jnp.sum(p, axis=-1, keepdims=True)
        acc_new = alpha * acc + jnp.einsum(
            'hqk,hkd->hqd', p.astype(jnp.bfloat16), v,
            preferred_element_type=jnp.float32)
        return m_new, l_new, acc_new

    carry0 = (jnp.full((H, Tq, 1), -jnp.inf, jnp.float32),
              jnp.zeros((H, Tq, 1), jnp.float32),
              jnp.zeros((H, Tq, D), jnp.float32))
    # causal skip: only KV tiles up to (and including) the query tile.
    m, l, acc = lax.fori_loop(0, qi + 1, kv_step, carry0)

    y = acc * (1.0 / l)                                 # exact normalisation
    # pack heads to (Tq, C) (static lane concat) -> ONE (Tq,C)x(C,C) matmul.
    y2 = jnp.concatenate([y[h] for h in range(H)], axis=-1).astype(jnp.bfloat16)
    x = x + jnp.dot(y2, wo_ref[...], preferred_element_type=jnp.float32)

    # MLP: relu(x)^2 with the hidden dim processed in chunks.
    xn2 = _rms_norm(x).astype(jnp.bfloat16)

    def mlp_step(j, acc_m):
        h = jnp.dot(xn2, wfc_ref[j], preferred_element_type=jnp.float32)
        h = jnp.square(jnp.maximum(h, 0.0)).astype(jnp.bfloat16)
        return acc_m + jnp.dot(h, wpr_ref[j], preferred_element_type=jnp.float32)

    if n_hidden_chunks == 1:
        m_mlp = mlp_step(0, jnp.zeros_like(x))
    else:
        m_mlp = lax.fori_loop(0, n_hidden_chunks, mlp_step, jnp.zeros_like(x))

    x_out_ref[0] = x + m_mlp


# ----------------------------------------------------------------------------
# Wrapper
# ----------------------------------------------------------------------------
def _block_forward(x, v1, x0, prep, *, single_buffer_weights):
    B, T, C = x.shape
    H = prep['n_head']
    D = C // H
    assert C == prep['n_embd'] and C % H == 0 and D % 2 == 0

    tq = _pick_tile(T)
    n_t = T // tq
    tk = tq
    hk = prep['hidden_chunk']
    n_hc = prep['n_hidden_chunks']

    cosf, sinf = _rotary_tables(T, D)
    params = prep['params']

    smem_spec = pl.BlockSpec(memory_space=pltpu.MemorySpace.SMEM)

    def const_spec(shape):
        # Grid-invariant weights: a single VMEM buffer suffices (halves weight
        # residency vs. the default double-buffering).
        idx = lambda b, i: (0,) * len(shape)
        if single_buffer_weights:
            return pl.BlockSpec(shape, idx, pipeline_mode=pl.Buffered(1))
        return pl.BlockSpec(shape, idx)

    seq_tile = pl.BlockSpec((1, tq, C), lambda b, i: (b, i, 0))
    head_tile = pl.BlockSpec((1, H, tq, D), lambda b, i: (b, 0, i, 0))
    head_full = pl.BlockSpec((1, H, T, D), lambda b, i: (b, 0, 0, 0))
    rot_tile = pl.BlockSpec((tq, D), lambda b, i: (i, 0))

    cparams = pltpu.CompilerParams(
        dimension_semantics=("parallel", "parallel"),
        vmem_limit_bytes=_vmem_limit_bytes())

    qkv_out_shapes = [jax.ShapeDtypeStruct((B, H, T, D), jnp.bfloat16)] * 3
    qkv_out_specs = [head_tile, head_tile, head_tile]

    if v1 is not None:
        # free reshape into the packed layout; no transpose, no write-back.
        v1_packed = v1.reshape(B, T, C).astype(jnp.float32)
        k1 = functools.partial(_qkv_kernel_with_v1, n_head=H, head_dim=D)
        q_rot, k_rot, v_mix = pl.pallas_call(
            k1,
            out_shape=tuple(qkv_out_shapes),
            grid=(B, n_t),
            in_specs=[smem_spec, seq_tile, seq_tile, seq_tile,
                      const_spec((C, 3 * C)), rot_tile, rot_tile],
            out_specs=tuple(qkv_out_specs),
            compiler_params=cparams,
        )(params, x, x0, v1_packed, prep['w_qkv'], cosf, sinf)
        v1_ret = v1
    else:
        k1 = functools.partial(_qkv_kernel_no_v1, n_head=H, head_dim=D)
        q_rot, k_rot, v_mix, v1_packed = pl.pallas_call(
            k1,
            out_shape=tuple(qkv_out_shapes
                            + [jax.ShapeDtypeStruct((B, T, C), jnp.float32)]),
            grid=(B, n_t),
            in_specs=[smem_spec, seq_tile, seq_tile,
                      const_spec((C, 3 * C)), rot_tile, rot_tile],
            out_specs=tuple(qkv_out_specs + [seq_tile]),
            compiler_params=cparams,
        )(params, x, x0, prep['w_qkv'], cosf, sinf)
        v1_ret = v1_packed.reshape(B, T, H, D)          # free reshape

    k2 = functools.partial(_attn_mlp_kernel, n_head=H, head_dim=D,
                           tq=tq, tk=tk, n_hidden_chunks=n_hc)
    x_out = pl.pallas_call(
        k2,
        out_shape=jax.ShapeDtypeStruct((B, T, C), jnp.float32),
        grid=(B, n_t),
        in_specs=[smem_spec, seq_tile, seq_tile, head_tile, head_full,
                  head_full, const_spec((C, C)), const_spec((n_hc, C, hk)),
                  const_spec((n_hc, hk, C))],
        out_specs=seq_tile,
        compiler_params=cparams,
    )(params, x, x0, q_rot, k_rot, v_mix, prep['wo'], prep['wfc'], prep['wpr'])

    return x_out, v1_ret


def block_forward(x, v1, x0, prep):
    """x, x0: (B,T,C) f32. v1: (B,T,H,D) f32 or None.
    Returns (x_out (B,T,C) f32, v1 (B,T,H,D) f32)."""
    try:
        return _block_forward(x, v1, x0, prep, single_buffer_weights=True)
    except Exception:
        # pl.Buffered(1) (single-buffered grid-invariant weights) may not be
        # accepted by every jax/Mosaic version; fall back to default buffering.
        return _block_forward(x, v1, x0, prep, single_buffer_weights=False)


# ----------------------------------------------------------------------------
# Pure-JAX f32 reference (mirrors the PyTorch module)
# ----------------------------------------------------------------------------
def block_reference(x, v1, x0, weights, n_head):
    wq, wk, wv, wo, wfc, wpr, lambdas, lamb = weights
    B, T, C = x.shape
    D = C // n_head
    d2 = D // 2

    inv_freq = 1.0 / (10000.0 ** (jnp.arange(0, D, 2, dtype=jnp.float32) / D))
    freqs = jnp.outer(jnp.arange(T, dtype=jnp.float32), inv_freq)
    cos = jnp.cos(freqs).astype(jnp.bfloat16).astype(jnp.float32)[None, :, None, :]
    sin = jnp.sin(freqs).astype(jnp.bfloat16).astype(jnp.float32)[None, :, None, :]

    x = lambdas[0] * x + lambdas[1] * x0
    xn = _rms_norm(x)
    q = (xn @ wq).reshape(B, T, n_head, D)
    k = (xn @ wk).reshape(B, T, n_head, D)
    v = (xn @ wv).reshape(B, T, n_head, D)
    if v1 is None:
        v1 = v
    vm = (1.0 - lamb) * v + lamb * v1
    q, k = _rms_norm(q), _rms_norm(k)

    def rope(z):
        z1, z2 = z[..., :d2], z[..., d2:]
        return jnp.concatenate([z1 * cos + z2 * sin, -z1 * sin + z2 * cos], -1)

    q, k = rope(q), rope(k)
    s = jnp.einsum('bqhd,bkhd->bhqk', q, k) / math.sqrt(D)
    mask = jnp.tril(jnp.ones((T, T), bool))
    s = jnp.where(mask[None, None], s, -1e30)
    p = jax.nn.softmax(s, axis=-1)
    y = jnp.einsum('bhqk,bkhd->bqhd', p, vm).reshape(B, T, C)
    x = x + y @ wo

    xn2 = _rms_norm(x)
    h = jnp.square(jax.nn.relu(xn2 @ wfc))
    x = x + h @ wpr
    return x, v1


# ----------------------------------------------------------------------------
def make_weights(key, n_embd):
    ks = jax.random.split(key, 6)

    def lin(k, fan_in, fan_out, scale=1.0):
        bound = 1.0 / math.sqrt(fan_in)
        w = jax.random.uniform(k, (fan_in, fan_out), jnp.float32, -bound, bound)
        return w * scale

    wq = lin(ks[0], n_embd, n_embd)
    wk = lin(ks[1], n_embd, n_embd)
    wv = lin(ks[2], n_embd, n_embd)
    wo = lin(ks[3], n_embd, n_embd, scale=0.01)        # attn c_proj *= 0.01
    wfc = lin(ks[4], n_embd, 4 * n_embd)
    wpr = lin(ks[5], 4 * n_embd, n_embd, scale=0.01)   # mlp c_proj *= 0.01
    lambdas = jnp.array([1.0, 0.0], jnp.float32)
    lamb = jnp.float32(0.5)
    return (wq, wk, wv, wo, wfc, wpr, lambdas, lamb)


if __name__ == "__main__":
    B, T, n_embd, n_head = 2, 16, 128, 2
    head_dim = n_embd // n_head

    key = jax.random.PRNGKey(0)
    k_x, k_x0, k_v1, k_w = jax.random.split(key, 4)
    x = jax.random.normal(k_x, (B, T, n_embd), jnp.float32)
    x0 = jax.random.normal(k_x0, (B, T, n_embd), jnp.float32)
    v1 = jax.random.normal(k_v1, (B, T, n_head, head_dim), jnp.float32)
    weights = make_weights(k_w, n_embd)
    prep = prepare_block_weights(weights, n_head)   # one-time weight packing

    # bf16 MXU operands (f32 accumulation) vs. a pure-f32 reference -> 1e-2 tol
    TOL = dict(rtol=1e-2, atol=1e-2)

    # case 1: v1 provided
    out_x, out_v1 = block_forward(x, v1, x0, prep)
    jax.block_until_ready((out_x, out_v1))
    ref_x, ref_v1 = block_reference(x, v1, x0, weights, n_head)
    np.testing.assert_allclose(np.asarray(out_x), np.asarray(ref_x), **TOL)
    np.testing.assert_allclose(np.asarray(out_v1), np.asarray(ref_v1), **TOL)

    # case 2: v1 is None (first block in a stack)
    out_x2, out_v12 = block_forward(x, None, x0, prep)
    jax.block_until_ready((out_x2, out_v12))
    ref_x2, ref_v12 = block_reference(x, None, x0, weights, n_head)
    np.testing.assert_allclose(np.asarray(out_x2), np.asarray(ref_x2), **TOL)
    np.testing.assert_allclose(np.asarray(out_v12), np.asarray(ref_v12), **TOL)

    print("KERNEL_OK")
</pallas_src>

<mosaic_0001>
module attributes {stable_mosaic.version = 11 : i64} {
  func.func @_qkv_kernel_with_v1(%arg0: i32, %arg1: i32, %arg2: memref<3xf32, #tpu.memory_space<smem>>, %arg3: memref<1x16x128xf32, #tpu.memory_space<vmem>>, %arg4: memref<1x16x128xf32, #tpu.memory_space<vmem>>, %arg5: memref<1x16x128xf32, #tpu.memory_space<vmem>>, %arg6: memref<128x384xbf16, #tpu.memory_space<vmem>>, %arg7: memref<16x64xf32, #tpu.memory_space<vmem>>, %arg8: memref<16x64xf32, #tpu.memory_space<vmem>>, %arg9: memref<1x2x16x64xbf16, #tpu.memory_space<vmem>>, %arg10: memref<1x2x16x64xbf16, #tpu.memory_space<vmem>>, %arg11: memref<1x2x16x64xbf16, #tpu.memory_space<vmem>>) attributes {dimension_semantics = [#tpu.dimension_semantics<parallel>, #tpu.dimension_semantics<parallel>], iteration_bounds = array<i64: 2, 1>, scalar_prefetch = 0 : i64, scratch_operands = 0 : i64, tpu.core_type = #tpu.core_type<tc>, window_params = [{transform_indices = @transform_0, window_bounds = array<i64: 3>}, {transform_indices = @transform_1, window_bounds = array<i64: 1, 16, 128>}, {transform_indices = @transform_2, window_bounds = array<i64: 1, 16, 128>}, {transform_indices = @transform_3, window_bounds = array<i64: 1, 16, 128>}, {pipeline_mode = #tpu.pipeline_mode<synchronous>, transform_indices = @transform_4, window_bounds = array<i64: 128, 384>}, {transform_indices = @transform_5, window_bounds = array<i64: 16, 64>}, {transform_indices = @transform_6, window_bounds = array<i64: 16, 64>}, {transform_indices = @transform_7, window_bounds = array<i64: 1, 2, 16, 64>}, {transform_indices = @transform_8, window_bounds = array<i64: 1, 2, 16, 64>}, {transform_indices = @transform_9, window_bounds = array<i64: 1, 2, 16, 64>}]} {
    %c0 = arith.constant 0 : index
    %c0_0 = arith.constant 0 : index
    %c0_1 = arith.constant 0 : index
    %0 = vector.load %arg5[%c0, %c0_0, %c0_1] : memref<1x16x128xf32, #tpu.memory_space<vmem>>, vector<1x16x128xf32>
    %1 = vector.shape_cast %0 : vector<1x16x128xf32> to vector<16x128xf32>
    %c0_2 = arith.constant 0 : index
    %2 = memref.load %arg2[%c0_2] : memref<3xf32, #tpu.memory_space<smem>>
    %c1 = arith.constant 1 : index
    %3 = memref.load %arg2[%c1] : memref<3xf32, #tpu.memory_space<smem>>
    %c2 = arith.constant 2 : index
    %4 = memref.load %arg2[%c2] : memref<3xf32, #tpu.memory_space<smem>>
    %c0_3 = arith.constant 0 : index
    %c0_4 = arith.constant 0 : index
    %c0_5 = arith.constant 0 : index
    %5 = vector.load %arg3[%c0_3, %c0_4, %c0_5] : memref<1x16x128xf32, #tpu.memory_space<vmem>>, vector<1x16x128xf32>
    %6 = vector.shape_cast %5 : vector<1x16x128xf32> to vector<16x128xf32>
    %7 = vector.broadcast %2 : f32 to vector<16x128xf32>
    %8 = arith.mulf %7, %6 : vector<16x128xf32>
    %c0_6 = arith.constant 0 : index
    %c0_7 = arith.constant 0 : index
    %c0_8 = arith.constant 0 : index
    %9 = vector.load %arg4[%c0_6, %c0_7, %c0_8] : memref<1x16x128xf32, #tpu.memory_space<vmem>>, vector<1x16x128xf32>
    %10 = vector.shape_cast %9 : vector<1x16x128xf32> to vector<16x128xf32>
    %11 = vector.broadcast %3 : f32 to vector<16x128xf32>
    %12 = arith.mulf %11, %10 : vector<16x128xf32>
    %13 = arith.addf %8, %12 : vector<16x128xf32>
    %14 = arith.mulf %13, %13 : vector<16x128xf32>
    %cst = arith.constant dense<0.000000e+00> : vector<16xf32>
    %15 = vector.multi_reduction <add>, %14, %cst [1] : vector<16x128xf32> to vector<16xf32>
    %16 = vector.shape_cast %15 : vector<16xf32> to vector<16x1xf32>
    %cst_9 = arith.constant 1.280000e+02 : f32
    %17 = vector.broadcast %cst_9 : f32 to vector<16x1xf32>
    %18 = arith.divf %16, %17 : vector<16x1xf32>
    %cst_10 = arith.constant 1.1920929E-7 : f32
    %19 = vector.broadcast %cst_10 : f32 to vector<16x1xf32>
    %20 = arith.addf %18, %19 : vector<16x1xf32>
    %21 = math.rsqrt %20 : vector<16x1xf32>
    %22 = vector.broadcast %21 : vector<16x1xf32> to vector<16x128xf32>
    %23 = arith.mulf %13, %22 : vector<16x128xf32>
    %24 = arith.truncf %23 : vector<16x128xf32> to vector<16x128xbf16>
    %c0_11 = arith.constant 0 : index
    %c0_12 = arith.constant 0 : index
    %25 = vector.load %arg6[%c0_11, %c0_12] : memref<128x384xbf16, #tpu.memory_space<vmem>>, vector<128x384xbf16>
    %cst_13 = arith.constant dense<0.000000e+00> : vector<16x384xf32>
    %26 = tpu.matmul %24, %25, %cst_13 {dimension_numbers = #tpu.dot_dimension_numbers<[1], [0], [0], [1], [0, 0, 1, 1], [], []>} : vector<16x128xbf16>, vector<128x384xbf16>, vector<16x384xf32> -> vector<16x384xf32>
    %27 = vector.extract_strided_slice %26 {offsets = [0, 0], sizes = [16, 128], strides = [1, 1]} : vector<16x384xf32> to vector<16x128xf32>
    %28 = vector.extract_strided_slice %26 {offsets = [0, 128], sizes = [16, 128], strides = [1, 1]} : vector<16x384xf32> to vector<16x128xf32>
    %29 = vector.extract_strided_slice %26 {offsets = [0, 256], sizes = [16, 128], strides = [1, 1]} : vector<16x384xf32> to vector<16x128xf32>
    %cst_14 = arith.constant 1.000000e+00 : f32
    %30 = arith.subf %cst_14, %4 : f32
    %31 = vector.broadcast %30 : f32 to vector<16x128xf32>
    %32 = arith.mulf %31, %29 : vector<16x128xf32>
    %33 = vector.broadcast %4 : f32 to vector<16x128xf32>
    %34 = arith.mulf %33, %1 : vector<16x128xf32>
    %35 = arith.addf %32, %34 : vector<16x128xf32>
    %36 = vector.extract_strided_slice %27 {offsets = [0, 0], sizes = [16, 64], strides = [1, 1]} : vector<16x128xf32> to vector<16x64xf32>
    %37 = vector.extract_strided_slice %27 {offsets = [0, 64], sizes = [16, 64], strides = [1, 1]} : vector<16x128xf32> to vector<16x64xf32>
    %38 = vector.shape_cast %36 : vector<16x64xf32> to vector<1x16x64xf32>
    %39 = vector.shape_cast %37 : vector<16x64xf32> to vector<1x16x64xf32>
    %40 = tpu.concatenate %38, %39 in 0 : vector<1x16x64xf32>, vector<1x16x64xf32> -> vector<2x16x64xf32>
    %41 = arith.mulf %40, %40 : vector<2x16x64xf32>
    %cst_15 = arith.constant dense<0.000000e+00> : vector<2x16xf32>
    %42 = vector.multi_reduction <add>, %41, %cst_15 [2] : vector<2x16x64xf32> to vector<2x16xf32>
    %43 = vector.shape_cast %42 : vector<2x16xf32> to vector<2x16x1xf32>
    %cst_16 = arith.constant 6.400000e+01 : f32
    %44 = vector.broadcast %cst_16 : f32 to vector<2x16x1xf32>
    %45 = arith.divf %43, %44 : vector<2x16x1xf32>
    %cst_17 = arith.constant 1.1920929E-7 : f32
    %46 = vector.broadcast %cst_17 : f32 to vector<2x16x1xf32>
    %47 = arith.addf %45, %46 : vector<2x16x1xf32>
    %48 = math.rsqrt %47 : vector<2x16x1xf32>
    %49 = vector.broadcast %48 : vector<2x16x1xf32> to vector<2x16x64xf32>
    %50 = arith.mulf %40, %49 : vector<2x16x64xf32>
    %51 = vector.extract_strided_slice %28 {offsets = [0, 0], sizes = [16, 64], strides = [1, 1]} : vector<16x128xf32> to vector<16x64xf32>
    %52 = vector.extract_strided_slice %28 {offsets = [0, 64], sizes = [16, 64], strides = [1, 1]} : vector<16x128xf32> to vector<16x64xf32>
    %53 = vector.shape_cast %51 : vector<16x64xf32> to vector<1x16x64xf32>
    %54 = vector.shape_cast %52 : vector<16x64xf32> to vector<1x16x64xf32>
    %55 = tpu.concatenate %53, %54 in 0 : vector<1x16x64xf32>, vector<1x16x64xf32> -> vector<2x16x64xf32>
    %56 = arith.mulf %55, %55 : vector<2x16x64xf32>
    %cst_18 = arith.constant dense<0.000000e+00> : vector<2x16xf32>
    %57 = vector.multi_reduction <add>, %56, %cst_18 [2] : vector<2x16x64xf32> to vector<2x16xf32>
    %58 = vector.shape_cast %57 : vector<2x16xf32> to vector<2x16x1xf32>
    %cst_19 = arith.constant 6.400000e+01 : f32
    %59 = vector.broadcast %cst_19 : f32 to vector<2x16x1xf32>
    %60 = arith.divf %58, %59 : vector<2x16x1xf32>
    %cst_20 = arith.constant 1.1920929E-7 : f32
    %61 = vector.broadcast %cst_20 : f32 to vector<2x16x1xf32>
    %62 = arith.addf %60, %61 : vector<2x16x1xf32>
    %63 = math.rsqrt %62 : vector<2x16x1xf32>
    %64 = vector.broadcast %63 : vector<2x16x1xf32> to vector<2x16x64xf32>
    %65 = arith.mulf %55, %64 : vector<2x16x64xf32>
    %c0_21 = arith.constant 0 : index
    %c0_22 = arith.constant 0 : index
    %66 = vector.load %arg7[%c0_21, %c0_22] : memref<16x64xf32, #tpu.memory_space<vmem>>, vector<16x64xf32>
    %67 = vector.shape_cast %66 : vector<16x64xf32> to vector<1x16x64xf32>
    %c0_23 = arith.constant 0 : index
    %c0_24 = arith.constant 0 : index
    %68 = vector.load %arg8[%c0_23, %c0_24] : memref<16x64xf32, #tpu.memory_space<vmem>>, vector<16x64xf32>
    %69 = vector.shape_cast %68 : vector<16x64xf32> to vector<1x16x64xf32>
    %70 = vector.extract_strided_slice %50 {offsets = [0, 0, 32], sizes = [2, 16, 32], strides = [1, 1, 1]} : vector<2x16x64xf32> to vector<2x16x32xf32>
    %71 = vector.extract_strided_slice %50 {offsets = [0, 0, 0], sizes = [2, 16, 32], strides = [1, 1, 1]} : vector<2x16x64xf32> to vector<2x16x32xf32>
    %72 = tpu.concatenate %70, %71 in 2 : vector<2x16x32xf32>, vector<2x16x32xf32> -> vector<2x16x64xf32>
    %73 = vector.broadcast %67 : vector<1x16x64xf32> to vector<2x16x64xf32>
    %74 = arith.mulf %50, %73 : vector<2x16x64xf32>
    %75 = vector.broadcast %69 : vector<1x16x64xf32> to vector<2x16x64xf32>
    %76 = arith.mulf %72, %75 : vector<2x16x64xf32>
    %77 = arith.addf %74, %76 : vector<2x16x64xf32>
    %78 = arith.truncf %77 : vector<2x16x64xf32> to vector<2x16x64xbf16>
    %c0_25 = arith.constant 0 : index
    %c0_26 = arith.constant 0 : index
    %c0_27 = arith.constant 0 : index
    %c0_28 = arith.constant 0 : index
    %79 = vector.load %arg9[%c0_25, %c0_26, %c0_27, %c0_28] : memref<1x2x16x64xbf16, #tpu.memory_space<vmem>>, vector<1x2x16x64xbf16>
    %80 = vector.shape_cast %79 : vector<1x2x16x64xbf16> to vector<2x16x64xbf16>
    %81 = vector.shape_cast %78 : vector<2x16x64xbf16> to vector<1x2x16x64xbf16>
    tpu.vector_store %arg9[%c0_25, %c0_26, %c0_27, %c0_28], %81 {strides = array<i32>} : memref<1x2x16x64xbf16, #tpu.memory_space<vmem>>, vector<1x2x16x64xbf16>,
    %82 = vector.extract_strided_slice %65 {offsets = [0, 0, 32], sizes = [2, 16, 32], strides = [1, 1, 1]} : vector<2x16x64xf32> to vector<2x16x32xf32>
    %83 = vector.extract_strided_slice %65 {offsets = [0, 0, 0], sizes = [2, 16, 32], strides = [1, 1, 1]} : vector<2x16x64xf32> to vector<2x16x32xf32>
    %84 = tpu.concatenate %82, %83 in 2 : vector<2x16x32xf32>, vector<2x16x32xf32> -> vector<2x16x64xf32>
    %85 = vector.broadcast %67 : vector<1x16x64xf32> to vector<2x16x64xf32>
    %86 = arith.mulf %65, %85 : vector<2x16x64xf32>
    %87 = vector.broadcast %69 : vector<1x16x64xf32> to vector<2x16x64xf32>
    %88 = arith.mulf %84, %87 : vector<2x16x64xf32>
    %89 = arith.addf %86, %88 : vector<2x16x64xf32>
    %90 = arith.truncf %89 : vector<2x16x64xf32> to vector<2x16x64xbf16>
    %c0_29 = arith.constant 0 : index
    %c0_30 = arith.constant 0 : index
    %c0_31 = arith.constant 0 : index
    %c0_32 = arith.constant 0 : index
    %91 = vector.load %arg10[%c0_29, %c0_30, %c0_31, %c0_32] : memref<1x2x16x64xbf16, #tpu.memory_space<vmem>>, vector<1x2x16x64xbf16>
    %92 = vector.shape_cast %91 : vector<1x2x16x64xbf16> to vector<2x16x64xbf16>
    %93 = vector.shape_cast %90 : vector<2x16x64xbf16> to vector<1x2x16x64xbf16>
    tpu.vector_store %arg10[%c0_29, %c0_30, %c0_31, %c0_32], %93 {strides = array<i32>} : memref<1x2x16x64xbf16, #tpu.memory_space<vmem>>, vector<1x2x16x64xbf16>,
    %94 = vector.extract_strided_slice %35 {offsets = [0, 0], sizes = [16, 64], strides = [1, 1]} : vector<16x128xf32> to vector<16x64xf32>
    %95 = vector.extract_strided_slice %35 {offsets = [0, 64], sizes = [16, 64], strides = [1, 1]} : vector<16x128xf32> to vector<16x64xf32>
    %96 = vector.shape_cast %94 : vector<16x64xf32> to vector<1x16x64xf32>
    %97 = vector.shape_cast %95 : vector<16x64xf32> to vector<1x16x64xf32>
    %98 = tpu.concatenate %96, %97 in 0 : vector<1x16x64xf32>, vector<1x16x64xf32> -> vector<2x16x64xf32>
    %99 = arith.truncf %98 : vector<2x16x64xf32> to vector<2x16x64xbf16>
    %c0_33 = arith.constant 0 : index
    %c0_34 = arith.constant 0 : index
    %c0_35 = arith.constant 0 : index
    %c0_36 = arith.constant 0 : index
    %100 = vector.load %arg11[%c0_33, %c0_34, %c0_35, %c0_36] : memref<1x2x16x64xbf16, #tpu.memory_space<vmem>>, vector<1x2x16x64xbf16>
    %101 = vector.shape_cast %100 : vector<1x2x16x64xbf16> to vector<2x16x64xbf16>
    %102 = vector.shape_cast %99 : vector<2x16x64xbf16> to vector<1x2x16x64xbf16>
    tpu.vector_store %arg11[%c0_33, %c0_34, %c0_35, %c0_36], %102 {strides = array<i32>} : memref<1x2x16x64xbf16, #tpu.memory_space<vmem>>, vector<1x2x16x64xbf16>,
    return
  }
  func.func @transform_0(%arg0: i32, %arg1: i32) -> i32 {
    %c0_i32 = arith.constant 0 : i32
    %c0_i32_0 = arith.constant 0 : i32
    return %c0_i32 : i32
  }
  func.func @transform_1(%arg0: i32, %arg1: i32) -> (i32, i32, i32) {
    %c0_i32 = arith.constant 0 : i32
    %c0_i32_0 = arith.constant 0 : i32
    return %arg0, %arg1, %c0_i32 : i32, i32, i32
  }
  func.func @transform_2(%arg0: i32, %arg1: i32) -> (i32, i32, i32) {
    %c0_i32 = arith.constant 0 : i32
    %c0_i32_0 = arith.constant 0 : i32
    return %arg0, %arg1, %c0_i32 : i32, i32, i32
  }
  func.func @transform_3(%arg0: i32, %arg1: i32) -> (i32, i32, i32) {
    %c0_i32 = arith.constant 0 : i32
    %c0_i32_0 = arith.constant 0 : i32
    return %arg0, %arg1, %c0_i32 : i32, i32, i32
  }
  func.func @transform_4(%arg0: i32, %arg1: i32) -> (i32, i32) {
    %c0_i32 = arith.constant 0 : i32
    %c0_i32_0 = arith.constant 0 : i32
    %c0_i32_1 = arith.constant 0 : i32
    return %c0_i32, %c0_i32_0 : i32, i32
  }
  func.func @transform_5(%arg0: i32, %arg1: i32) -> (i32, i32) {
    %c0_i32 = arith.constant 0 : i32
    %c0_i32_0 = arith.constant 0 : i32
    return %arg1, %c0_i32 : i32, i32
  }
  func.func @transform_6(%arg0: i32, %arg1: i32) -> (i32, i32) {
    %c0_i32 = arith.constant 0 : i32
    %c0_i32_0 = arith.constant 0 : i32
    return %arg1, %c0_i32 : i32, i32
  }
  func.func @transform_7(%arg0: i32, %arg1: i32) -> (i32, i32, i32, i32) {
    %c0_i32 = arith.constant 0 : i32
    %c0_i32_0 = arith.constant 0 : i32
    %c0_i32_1 = arith.constant 0 : i32
    return %arg0, %c0_i32, %arg1, %c0_i32_0 : i32, i32, i32, i32
  }
  func.func @transform_8(%arg0: i32, %arg1: i32) -> (i32, i32, i32, i32) {
    %c0_i32 = arith.constant 0 : i32
    %c0_i32_0 = arith.constant 0 : i32
    %c0_i32_1 = arith.constant 0 : i32
    return %arg0, %c0_i32, %arg1, %c0_i32_0 : i32, i32, i32, i32
  }
  func.func @transform_9(%arg0: i32, %arg1: i32) -> (i32, i32, i32, i32) {
    %c0_i32 = arith.constant 0 : i32
    %c0_i32_0 = arith.constant 0 : i32
    %c0_i32_1 = arith.constant 0 : i32
    return %arg0, %c0_i32, %arg1, %c0_i32_0 : i32, i32, i32, i32
  }
}

module attributes {stable_mosaic.version = 11 : i64} {
  func.func @_qkv_kernel_with_v1(%arg0: i32, %arg1: i32, %arg2: memref<3xf32, #tpu.memory_space<smem>>, %arg3: memref<1x16x128xf32, #tpu.memory_space<vmem>>, %arg4: memref<1x16x128xf32, #tpu.memory_space<vmem>>, %arg5: memref<1x16x128xf32, #tpu.memory_space<vmem>>, %arg6: memref<128x384xbf16, #tpu.memory_space<vmem>>, %arg7: memref<16x64xf32, #tpu.memory_space<vmem>>, %arg8: memref<16x64xf32, #tpu.memory_space<vmem>>, %arg9: memref<1x2x16x64xbf16, #tpu.memory_space<vmem>>, %arg10: memref<1x2x16x64xbf16, #tpu.memory_space<vmem>>, %arg11: memref<1x2x16x64xbf16, #tpu.memory_space<vmem>>) attributes {dimension_semantics = [#tpu.dimension_semantics<parallel>, #tpu.dimension_semantics<parallel>], iteration_bounds = array<i64: 2, 1>, scalar_prefetch = 0 : i64, scratch_operands = 0 : i64, tpu.core_type = #tpu.core_type<tc>, window_params = [{transform_indices = @transform_0, window_bounds = array<i64: 3>}, {transform_indices = @transform_1, window_bounds = array<i64: 1, 16, 128>}, {transform_indices = @transform_2, window_bounds = array<i64: 1, 16, 128>}, {transform_indices = @transform_3, window_bounds = array<i64: 1, 16, 128>}, {pipeline_mode = #tpu.pipeline_mode<synchronous>, transform_indices = @transform_4, window_bounds = array<i64: 128, 384>}, {transform_indices = @transform_5, window_bounds = array<i64: 16, 64>}, {transform_indices = @transform_6, window_bounds = array<i64: 16, 64>}, {transform_indices = @transform_7, window_bounds = array<i64: 1, 2, 16, 64>}, {transform_indices = @transform_8, window_bounds = array<i64: 1, 2, 16, 64>}, {transform_indices = @transform_9, window_bounds = array<i64: 1, 2, 16, 64>}]} {
    %c0 = arith.constant 0 : index
    %c0_0 = arith.constant 0 : index
    %c0_1 = arith.constant 0 : index
    %0 = vector.load %arg5[%c0, %c0_0, %c0_1] : memref<1x16x128xf32, #tpu.memory_space<vmem>>, vector<1x16x128xf32>
    %1 = vector.shape_cast %0 : vector<1x16x128xf32> to vector<16x128xf32>
    %c0_2 = arith.constant 0 : index
    %2 = memref.load %arg2[%c0_2] : memref<3xf32, #tpu.memory_space<smem>>
    %c1 = arith.constant 1 : index
    %3 = memref.load %arg2[%c1] : memref<3xf32, #tpu.memory_space<smem>>
    %c2 = arith.constant 2 : index
    %4 = memref.load %arg2[%c2] : memref<3xf32, #tpu.memory_space<smem>>
    %c0_3 = arith.constant 0 : index
    %c0_4 = arith.constant 0 : index
    %c0_5 = arith.constant 0 : index
    %5 = vector.load %arg3[%c0_3, %c0_4, %c0_5] : memref<1x16x128xf32, #tpu.memory_space<vmem>>, vector<1x16x128xf32>
    %6 = vector.shape_cast %5 : vector<1x16x128xf32> to vector<16x128xf32>
    %7 = vector.broadcast %2 : f32 to vector<16x128xf32>
    %8 = arith.mulf %7, %6 : vector<16x128xf32>
    %c0_6 = arith.constant 0 : index
    %c0_7 = arith.constant 0 : index
    %c0_8 = arith.constant 0 : index
    %9 = vector.load %arg4[%c0_6, %c0_7, %c0_8] : memref<1x16x128xf32, #tpu.memory_space<vmem>>, vector<1x16x128xf32>
    %10 = vector.shape_cast %9 : vector<1x16x128xf32> to vector<16x128xf32>
    %11 = vector.broadcast %3 : f32 to vector<16x128xf32>
    %12 = arith.mulf %11, %10 : vector<16x128xf32>
    %13 = arith.addf %8, %12 : vector<16x128xf32>
    %14 = arith.mulf %13, %13 : vector<16x128xf32>
    %cst = arith.constant dense<0.000000e+00> : vector<16xf32>
    %15 = vector.multi_reduction <add>, %14, %cst [1] : vector<16x128xf32> to vector<16xf32>
    %16 = vector.shape_cast %15 : vector<16xf32> to vector<16x1xf32>
    %cst_9 = arith.constant 1.280000e+02 : f32
    %17 = vector.broadcast %cst_9 : f32 to vector<16x1xf32>
    %18 = arith.divf %16, %17 : vector<16x1xf32>
    %cst_10 = arith.constant 1.1920929E-7 : f32
    %19 = vector.broadcast %cst_10 : f32 to vector<16x1xf32>
    %20 = arith.addf %18, %19 : vector<16x1xf32>
    %21 = math.rsqrt %20 : vector<16x1xf32>
    %22 = vector.broadcast %21 : vector<16x1xf32> to vector<16x128xf32>
    %23 = arith.mulf %13, %22 : vector<16x128xf32>
    %24 = arith.truncf %23 : vector<16x128xf32> to vector<16x128xbf16>
    %c0_11 = arith.constant 0 : index
    %c0_12 = arith.constant 0 : index
    %25 = vector.load %arg6[%c0_11, %c0_12] : memref<128x384xbf16, #tpu.memory_space<vmem>>, vector<128x384xbf16>
    %cst_13 = arith.constant dense<0.000000e+00> : vector<16x384xf32>
    %26 = tpu.matmul %24, %25, %cst_13 {dimension_numbers = #tpu.dot_dimension_numbers<[1], [0], [0], [1], [0, 0, 1, 1], [], []>} : vector<16x128xbf16>, vector<128x384xbf16>, vector<16x384xf32> -> vector<16x384xf32>
    %27 = vector.extract_strided_slice %26 {offsets = [0, 0], sizes = [16, 128], strides = [1, 1]} : vector<16x384xf32> to vector<16x128xf32>
    %28 = vector.extract_strided_slice %26 {offsets = [0, 128], sizes = [16, 128], strides = [1, 1]} : vector<16x384xf32> to vector<16x128xf32>
    %29 = vector.extract_strided_slice %26 {offsets = [0, 256], sizes = [16, 128], strides = [1, 1]} : vector<16x384xf32> to vector<16x128xf32>
    %cst_14 = arith.constant 1.000000e+00 : f32
    %30 = arith.subf %cst_14, %4 : f32
    %31 = vector.broadcast %30 : f32 to vector<16x128xf32>
    %32 = arith.mulf %31, %29 : vector<16x128xf32>
    %33 = vector.broadcast %4 : f32 to vector<16x128xf32>
    %34 = arith.mulf %33, %1 : vector<16x128xf32>
    %35 = arith.addf %32, %34 : vector<16x128xf32>
    %36 = vector.extract_strided_slice %27 {offsets = [0, 0], sizes = [16, 64], strides = [1, 1]} : vector<16x128xf32> to vector<16x64xf32>
    %37 = vector.extract_strided_slice %27 {offsets = [0, 64], sizes = [16, 64], strides = [1, 1]} : vector<16x128xf32> to vector<16x64xf32>
    %38 = vector.shape_cast %36 : vector<16x64xf32> to vector<1x16x64xf32>
    %39 = vector.shape_cast %37 : vector<16x64xf32> to vector<1x16x64xf32>
    %40 = tpu.concatenate %38, %39 in 0 : vector<1x16x64xf32>, vector<1x16x64xf32> -> vector<2x16x64xf32>
    %41 = arith.mulf %40, %40 : vector<2x16x64xf32>
    %cst_15 = arith.constant dense<0.000000e+00> : vector<2x16xf32>
    %42 = vector.multi_reduction <add>, %41, %cst_15 [2] : vector<2x16x64xf32> to vector<2x16xf32>
    %43 = vector.shape_cast %42 : vector<2x16xf32> to vector<2x16x1xf32>
    %cst_16 = arith.constant 6.400000e+01 : f32
    %44 = vector.broadcast %cst_16 : f32 to vector<2x16x1xf32>
    %45 = arith.divf %43, %44 : vector<2x16x1xf32>
    %cst_17 = arith.constant 1.1920929E-7 : f32
    %46 = vector.broadcast %cst_17 : f32 to vector<2x16x1xf32>
    %47 = arith.addf %45, %46 : vector<2x16x1xf32>
    %48 = math.rsqrt %47 : vector<2x16x1xf32>
    %49 = vector.broadcast %48 : vector<2x16x1xf32> to vector<2x16x64xf32>
    %50 = arith.mulf %40, %49 : vector<2x16x64xf32>
    %51 = vector.extract_strided_slice %28 {offsets = [0, 0], sizes = [16, 64], strides = [1, 1]} : vector<16x128xf32> to vector<16x64xf32>
    %52 = vector.extract_strided_slice %28 {offsets = [0, 64], sizes = [16, 64], strides = [1, 1]} : vector<16x128xf32> to vector<16x64xf32>
    %53 = vector.shape_cast %51 : vector<16x64xf32> to vector<1x16x64xf32>
    %54 = vector.shape_cast %52 : vector<16x64xf32> to vector<1x16x64xf32>
    %55 = tpu.concatenate %53, %54 in 0 : vector<1x16x64xf32>, vector<1x16x64xf32> -> vector<2x16x64xf32>
    %56 = arith.mulf %55, %55 : vector<2x16x64xf32>
    %cst_18 = arith.constant dense<0.000000e+00> : vector<2x16xf32>
    %57 = vector.multi_reduction <add>, %56, %cst_18 [2] : vector<2x16x64xf32> to vector<2x16xf32>
    %58 = vector.shape_cast %57 : vector<2x16xf32> to vector<2x16x1xf32>
    %cst_19 = arith.constant 6.400000e+01 : f32
    %59 = vector.broadcast %cst_19 : f32 to vector<2x16x1xf32>
    %60 = arith.divf %58, %59 : vector<2x16x1xf32>
    %cst_20 = arith.constant 1.1920929E-7 : f32
    %61 = vector.broadcast %cst_20 : f32 to vector<2x16x1xf32>
    %62 = arith.addf %60, %61 : vector<2x16x1xf32>
    %63 = math.rsqrt %62 : vector<2x16x1xf32>
    %64 = vector.broadcast %63 : vector<2x16x1xf32> to vector<2x16x64xf32>
    %65 = arith.mulf %55, %64 : vector<2x16x64xf32>
    %c0_21 = arith.constant 0 : index
    %c0_22 = arith.constant 0 : index
    %66 = vector.load %arg7[%c0_21, %c0_22] : memref<16x64xf32, #tpu.memory_space<vmem>>, vector<16x64xf32>
    %67 = vector.shape_cast %66 : vector<16x64xf32> to vector<1x16x64xf32>
    %c0_23 = arith.constant 0 : index
    %c0_24 = arith.constant 0 : index
    %68 = vector.load %arg8[%c0_23, %c0_24] : memref<16x64xf32, #tpu.memory_space<vmem>>, vector<16x64xf32>
    %69 = vector.shape_cast %68 : vector<16x64xf32> to vector<1x16x64xf32>
    %70 = vector.extract_strided_slice %50 {offsets = [0, 0, 32], sizes = [2, 16, 32], strides = [1, 1, 1]} : vector<2x16x64xf32> to vector<2x16x32xf32>
    %71 = vector.extract_strided_slice %50 {offsets = [0, 0, 0], sizes = [2, 16, 32], strides = [1, 1, 1]} : vector<2x16x64xf32> to vector<2x16x32xf32>
    %72 = tpu.concatenate %70, %71 in 2 : vector<2x16x32xf32>, vector<2x16x32xf32> -> vector<2x16x64xf32>
    %73 = vector.broadcast %67 : vector<1x16x64xf32> to vector<2x16x64xf32>
    %74 = arith.mulf %50, %73 : vector<2x16x64xf32>
    %75 = vector.broadcast %69 : vector<1x16x64xf32> to vector<2x16x64xf32>
    %76 = arith.mulf %72, %75 : vector<2x16x64xf32>
    %77 = arith.addf %74, %76 : vector<2x16x64xf32>
    %78 = arith.truncf %77 : vector<2x16x64xf32> to vector<2x16x64xbf16>
    %c0_25 = arith.constant 0 : index
    %c0_26 = arith.constant 0 : index
    %c0_27 = arith.constant 0 : index
    %c0_28 = arith.constant 0 : index
    %79 = vector.load %arg9[%c0_25, %c0_26, %c0_27, %c0_28] : memref<1x2x16x64xbf16, #tpu.memory_space<vmem>>, vector<1x2x16x64xbf16>
    %80 = vector.shape_cast %79 : vector<1x2x16x64xbf16> to vector<2x16x64xbf16>
    %81 = vector.shape_cast %78 : vector<2x16x64xbf16> to vector<1x2x16x64xbf16>
    tpu.vector_store %arg9[%c0_25, %c0_26, %c0_27, %c0_28], %81 {strides = array<i32>} : memref<1x2x16x64xbf16, #tpu.memory_space<vmem>>, vector<1x2x16x64xbf16>,
    %82 = vector.extract_strided_slice %65 {offsets = [0, 0, 32], sizes = [2, 16, 32], strides = [1, 1, 1]} : vector<2x16x64xf32> to vector<2x16x32xf32>
    %83 = vector.extract_strided_slice %65 {offsets = [0, 0, 0], sizes = [2, 16, 32], strides = [1, 1, 1]} : vector<2x16x64xf32> to vector<2x16x32xf32>
    %84 = tpu.concatenate %82, %83 in 2 : vector<2x16x32xf32>, vector<2x16x32xf32> -> vector<2x16x64xf32>
    %85 = vector.broadcast %67 : vector<1x16x64xf32> to vector<2x16x64xf32>
    %86 = arith.mulf %65, %85 : vector<2x16x64xf32>
    %87 = vector.broadcast %69 : vector<1x16x64xf32> to vector<2x16x64xf32>
    %88 = arith.mulf %84, %87 : vector<2x16x64xf32>
    %89 = arith.addf %86, %88 : vector<2x16x64xf32>
    %90 = arith.truncf %89 : vector<2x16x64xf32> to vector<2x16x64xbf16>
    %c0_29 = arith.constant 0 : index
    %c0_30 = arith.constant 0 : index
    %c0_31 = arith.constant 0 : index
    %c0_32 = arith.constant 0 : index
    %91 = vector.load %arg10[%c0_29, %c0_30, %c0_31, %c0_32] : memref<1x2x16x64xbf16, #tpu.memory_space<vmem>>, vector<1x2x16x64xbf16>
    %92 = vector.shape_cast %91 : vector<1x2x16x64xbf16> to vector<2x16x64xbf16>
    %93 = vector.shape_cast %90 : vector<2x16x64xbf16> to vector<1x2x16x64xbf16>
    tpu.vector_store %arg10[%c0_29, %c0_30, %c0_31, %c0_32], %93 {strides = array<i32>} : memref<1x2x16x64xbf16, #tpu.memory_space<vmem>>, vector<1x2x16x64xbf16>,
    %94 = vector.extract_strided_slice %35 {offsets = [0, 0], sizes = [16, 64], strides = [1, 1]} : vector<16x128xf32> to vector<16x64xf32>
    %95 = vector.extract_strided_slice %35 {offsets = [0, 64], sizes = [16, 64], strides = [1, 1]} : vector<16x128xf32> to vector<16x64xf32>
    %96 = vector.shape_cast %94 : vector<16x64xf32> to vector<1x16x64xf32>
    %97 = vector.shape_cast %95 : vector<16x64xf32> to vector<1x16x64xf32>
    %98 = tpu.concatenate %96, %97 in 0 : vector<1x16x64xf32>, vector<1x16x64xf32> -> vector<2x16x64xf32>
    %99 = arith.truncf %98 : vector<2x16x64xf32> to vector<2x16x64xbf16>
    %c0_33 = arith.constant 0 : index
    %c0_34 = arith.constant 0 : index
    %c0_35 = arith.constant 0 : index
    %c0_36 = arith.constant 0 : index
    %100 = vector.load %arg11[%c0_33, %c0_34, %c0_35, %c0_36] : memref<1x2x16x64xbf16, #tpu.memory_space<vmem>>, vector<1x2x16x64xbf16>
    %101 = vector.shape_cast %100 : vector<1x2x16x64xbf16> to vector<2x16x64xbf16>
    %102 = vector.shape_cast %99 : vector<2x16x64xbf16> to vector<1x2x16x64xbf16>
    tpu.vector_store %arg11[%c0_33, %c0_34, %c0_35, %c0_36], %102 {strides = array<i32>} : memref<1x2x16x64xbf16, #tpu.memory_space<vmem>>, vector<1x2x16x64xbf16>,
    return
  }
  func.func @transform_0(%arg0: i32, %arg1: i32) -> i32 {
    %c0_i32 = arith.constant 0 : i32
    %c0_i32_0 = arith.constant 0 : i32
    return %c0_i32 : i32
  }
  func.func @transform_1(%arg0: i32, %arg1: i32) -> (i32, i32, i32) {
    %c0_i32 = arith.constant 0 : i32
    %c0_i32_0 = arith.constant 0 : i32
    return %arg0, %arg1, %c0_i32 : i32, i32, i32
  }
  func.func @transform_2(%arg0: i32, %arg1: i32) -> (i32, i32, i32) {
    %c0_i32 = arith.constant 0 : i32
    %c0_i32_0 = arith.constant 0 : i32
    return %arg0, %arg1, %c0_i32 : i32, i32, i32
  }
  func.func @transform_3(%arg0: i32, %arg1: i32) -> (i32, i32, i32) {
    %c0_i32 = arith.constant 0 : i32
    %c0_i32_0 = arith.constant 0 : i32
    return %arg0, %arg1, %c0_i32 : i32, i32, i32
  }
  func.func @transform_4(%arg0: i32, %arg1: i32) -> (i32, i32) {
    %c0_i32 = arith.constant 0 : i32
    %c0_i32_0 = arith.constant 0 : i32
    %c0_i32_1 = arith.constant 0 : i32
    return %c0_i32, %c0_i32_0 : i32, i32
  }
  func.func @transform_5(%arg0: i32, %arg1: i32) -> (i32, i32) {
    %c0_i32 = arith.constant 0 : i32
    %c0_i32_0 = arith.constant 0 : i32
    return %arg1, %c0_i32 : i32, i32
  }
  func.func @transform_6(%arg0: i32, %arg1: i32) -> (i32, i32) {
    %c0_i32 = arith.constant 0 : i32
    %c0_i32_0 = arith.constant 0 : i32
    return %arg1, %c0_i32 : i32, i32
  }
  func.func @transform_7(%arg0: i32, %arg1: i32) -> (i32, i32, i32, i32) {
    %c0_i32 = arith.constant 0 : i32
    %c0_i32_0 = arith.constant 0 : i32
    %c0_i32_1 = arith.constant 0 : i32
    return %arg0, %c0_i32, %arg1, %c0_i32_0 : i32, i32, i32, i32
  }
  func.func @transform_8(%arg0: i32, %arg1: i32) -> (i32, i32, i32, i32) {
    %c0_i32 = arith.constant 0 : i32
    %c0_i32_0 = arith.constant 0 : i32
    %c0_i32_1 = arith.constant 0 : i32
    return %arg0, %c0_i32, %arg1, %c0_i32_0 : i32, i32, i32, i32
  }
  func.func @transform_9(%arg0: i32, %arg1: i32) -> (i32, i32, i32, i32) {
    %c0_i32 = arith.constant 0 : i32
    %c0_i32_0 = arith.constant 0 : i32
    %c0_i32_1 = arith.constant 0 : i32
    return %arg0, %c0_i32, %arg1, %c0_i32_0 : i32, i32, i32, i32
  }
}

</mosaic_0001>

<llo_original>
// kernel: tpu_custom_call.1
$region0: #{tpu_custom_call.1}
  #allocation0 [shape = 'u32[]', space=smem, size = 0x4, offset = 0x4, fixed_abs, tag = 'smem constant byte address 0x4 - core index']
  #allocation1 [shape = 'u32[144,128]{1,0:T(1,128)}', space=vmem, size = 0x12000, scoped, tag = 'internal scratch']
  %s0 = inlined_call_operand.hbm [shape: f32[3], index: 0, kind: input, shape index: {}]
  %s1 = inlined_call_operand.hbm [shape: f32[2,16,128], index: 1, kind: input, shape index: {}]
  %s2 = inlined_call_operand.hbm [shape: f32[2,16,128], index: 2, kind: input, shape index: {}]
  %s3 = inlined_call_operand.hbm [shape: f32[2,16,128], index: 3, kind: input, shape index: {}]
  %s4 = inlined_call_operand.hbm [shape: bf16[128,384], index: 4, kind: input, shape index: {}]
  %s5 = inlined_call_operand.hbm [shape: f32[16,64], index: 5, kind: input, shape index: {}]
  %s6 = inlined_call_operand.hbm [shape: f32[16,64], index: 6, kind: input, shape index: {}]
  %s7 = inlined_call_operand.hbm [shape: bf16[2,2,16,64], index: 7, kind: output, shape index: {0}]
  %s8 = inlined_call_operand.hbm [shape: bf16[2,2,16,64], index: 8, kind: output, shape index: {1}]
  %s9 = inlined_call_operand.hbm [shape: bf16[2,2,16,64], index: 9, kind: output, shape index: {2}]
  %10 = xla_tuple %s7, %s8, %s9
  %s11 = sld [smem:[#allocation0]]
  $region105: #{tpu_custom_call.1} parent=0
    _
  %s13 = ssub.s32 1, %s11
  %s14 = scalar_select 0, %s13, %s11
  $region1: #{tpu_custom_call.1} parent=0
    #allocation2 [shape = 'u8[512]{0}', space=smem, size = 0x200, scoped, tag = 'input window, operand 0, single buffered']
    #allocation3 [shape = 's32[2]{0}', space=sflag, size = 0x8, scoped, tag = 'scoped memory for tpu_custom_call.1']
    #allocation4 [shape = 's32[2]{0}', space=sflag, size = 0x8, scoped, tag = 'scoped memory for tpu_custom_call.1']
    #allocation5 [shape = 's32[2]{0}', space=sflag, size = 0x8, scoped, tag = 'scoped memory for tpu_custom_call.1']
    #allocation6 [shape = 'u8[16384]{0}', space=vmem, size = 0x4000, scoped, tag = 'input window, operand 1']
    #allocation7 [shape = 'u8[16384]{0}', space=vmem, size = 0x4000, scoped, tag = 'input window, operand 2']
    #allocation8 [shape = 's32[2]{0}', space=sflag, size = 0x8, scoped, tag = 'scoped memory for tpu_custom_call.1']
    #allocation9 [shape = 'u8[16384]{0}', space=vmem, size = 0x4000, scoped, tag = 'input window, operand 3']
    #allocation10 [shape = 'u8[98304]{0}', space=vmem, size = 0x18000, scoped, tag = 'input window, operand 4, single buffered']
    #allocation11 [shape = 's32[1]{0}', space=sflag, size = 0x4, scoped, tag = 'scoped memory for tpu_custom_call.1']
    #allocation12 [shape = 'u8[8192]{0}', space=vmem, size = 0x2000, scoped, tag = 'input window, operand 5, single buffered']
    #allocation13 [shape = 'u8[8192]{0}', space=vmem, size = 0x2000, scoped, tag = 'input window, operand 6, single buffered']
    #allocation14 [shape = 's32[1]{0}', space=sflag, size = 0x4, scoped, tag = 'scoped memory for tpu_custom_call.1']
    #allocation15 [shape = 'u8[16384]{0}', space=vmem, size = 0x4000, scoped, tag = 'output window, operand 0']
    #allocation16 [shape = 'u8[16384]{0}', space=vmem, size = 0x4000, scoped, tag = 'output window, operand 1']
    #allocation17 [shape = 's32[2]{0}', space=sflag, size = 0x8, scoped, tag = 'scoped memory for tpu_custom_call.1']
    #allocation18 [shape = 'u8[16384]{0}', space=vmem, size = 0x4000, scoped, tag = 'output window, operand 2']
    %15 = vsyncpa [#allocation5], 0
    %16 = vsyncpa [#allocation3], 0
    %s17 = scalar_lea.sflag [#allocation3], 1
    %18 = vsyncpa %s17, 0
    %19 = vsyncpa [#allocation8], 0
    %s20 = scalar_lea.sflag [#allocation8], 1
    %21 = vsyncpa %s20, 0
    %22 = vsyncpa [#allocation11], 0
    %23 = vsyncpa [#allocation14], 0
    %24 = vsyncpa [#allocation4], 0
    %s25 = scalar_lea.sflag [#allocation4], 1
    %26 = vsyncpa %s25, 0
    %27 = vsyncpa [#allocation17], 0
    %s28 = scalar_lea.sflag [#allocation17], 1
    %29 = vsyncpa %s28, 0
    loop: start=0, step=1, limit=4
    $region2: #{tpu_custom_call.1} parent=1 // loop_pre_header
      _
    $region3: #{tpu_custom_call.1} parent=1 // loop_header
      %s31 = sphi 0, %s35
      %p32 = scmp.ge.s32.totalorder %s31, 4
      %s38 = sphi 0, %s50
      %s39 = sphi 0, %s46
      %s40 = sphi 0, %s38
      %s41 = sphi 0, %s39
      %s42 = sphi 0, %s40
      %s43 = sphi 0, %s41
      %s51 = sphi 0, %s51
      %s53 = sphi 0, %s51
      %s54 = sphi 0, %s53
      %s68 = sphi 0, %s54
      %s76 = sphi 0, %s78
      %s79 = sphi 0, %s76
      %s80 = sphi 0, %s79
      %s96 = sphi 0, %s80
      %s104 = sphi 0, %s106
      %s107 = sphi 0, %s104
      %s108 = sphi 0, %s107
      %s124 = sphi 0, %s108
      %s132 = sphi 0, %s134
      %s135 = sphi 0, %s132
      %s136 = sphi 0, %s135
      %s152 = sphi 0, %s136
      %s156 = sphi 0, %s156
      %s158 = sphi 0, %s156
      %s159 = sphi 0, %s158
      %s173 = sphi 0, %s159
      %s179 = sphi 0, %s181
      %s182 = sphi 0, %s179
      %s183 = sphi 0, %s182
      %s199 = sphi 0, %s183
      %s205 = sphi 0, %s207
      %s208 = sphi 0, %s205
      %s209 = sphi 0, %s208
      %s225 = sphi 0, %s209
      %s233 = sphi 0, %s235
      %s236 = sphi 0, %s233
      %s237 = sphi 0, %s236
      %s253 = sphi 0, %s237
      %s261 = sphi 0, %s263
      %s264 = sphi 0, %s261
      %s265 = sphi 0, %s264
      %s281 = sphi 0, %s265
      %s289 = sphi 0, %s291
      %s292 = sphi 0, %s289
      %s293 = sphi 0, %s292
      %s309 = sphi 0, %s293
    $region4: #{tpu_custom_call.1} parent=1 // loop_header_branch
      %34 = sbr.rel (%p32) target = $region8
    $region5: #{tpu_custom_call.1} parent=1 // loop_body
      %s36 = ssub.s32 %s31, 1
      %s37 = ssub.s32 %s31, 2
      %s44 = sadd.s32 1, %s39
      %p45 = scmp.ge.s32.totalorder %s44, 1
      %s46 = scalar_select %p45, 0, %s44
      %s47 = sadd.s32 1, %s38
      %s48 = scalar_select %p45, %s47, %s38
      %p49 = scmp.ge.s32.totalorder %s48, 2
      %s50 = scalar_select %p49, 0, %s48
      %s52 = sadd.s32 %s51, 1
      %p55 = scmp.eq.s32.totalorder %s31, 1
      %p56 = scmp.ne.s32.totalorder %s51, %s53
      %p57 = scmp.eq.s32.totalorder %s31, 0
      %p58 = por %p56, %p57
      %p59 = scmp.ne.s32.totalorder %s51, %s53
      %p60 = scmp.eq.s32.totalorder %s36, 1
      %p61 = por %p59, %p60
      %p62 = scmp.ne.s32.totalorder %s53, %s54
      %p63 = scmp.eq.s32.totalorder %s36, 0
      %p64 = por %p62, %p63
      %p65 = scmp.ne.s32.totalorder %s53, %s54
      %p66 = scmp.eq.s32.totalorder %s37, 1
      %p67 = por %p65, %p66
      %p69 = scmp.ne.s32.totalorder %s54, %s68
      %p70 = scmp.eq.s32.totalorder %s37, 0
      %p71 = por %p69, %p70
      %s72 = ssub.s32 %s38, %s50
      %s73 = ssub.s32 %s39, %s46
      %s74 = sor.u32 %s72, %s73
      %p75 = scmp.eq.s32.totalorder %s74, 0
      %s77 = sadd.s32 %s76, 1
      %s78 = scalar_select %p75, %s76, %s77
      %p81 = pneg %p75
      %p82 = scmp.eq.s32.totalorder %s31, 1
      %p83 = por %p81, %p82
      %p84 = scmp.ne.s32.totalorder %s76, %s79
      %p85 = scmp.eq.s32.totalorder %s31, 0
      %p86 = por %p84, %p85
      %p87 = scmp.ne.s32.totalorder %s76, %s79
      %p88 = scmp.eq.s32.totalorder %s36, 1
      %p89 = por %p87, %p88
      %p90 = scmp.ne.s32.totalorder %s79, %s80
      %p91 = scmp.eq.s32.totalorder %s36, 0
      %p92 = por %p90, %p91
      %p93 = scmp.ne.s32.totalorder %s79, %s80
      %p94 = scmp.eq.s32.totalorder %s37, 1
      %p95 = por %p93, %p94
      %p97 = scmp.ne.s32.totalorder %s80, %s96
      %p98 = scmp.eq.s32.totalorder %s37, 0
      %p99 = por %p97, %p98
      %s100 = ssub.s32 %s38, %s50
      %s101 = ssub.s32 %s39, %s46
      %s102 = sor.u32 %s100, %s101
      %p103 = scmp.eq.s32.totalorder %s102, 0
      %s105 = sadd.s32 %s104, 1
      %s106 = scalar_select %p103, %s104, %s105
      %p109 = pneg %p103
      %p110 = scmp.eq.s32.totalorder %s31, 1
      %p111 = por %p109, %p110
      %p112 = scmp.ne.s32.totalorder %s104, %s107
      %p113 = scmp.eq.s32.totalorder %s31, 0
      %p114 = por %p112, %p113
      %p115 = scmp.ne.s32.totalorder %s104, %s107
      %p116 = scmp.eq.s32.totalorder %s36, 1
      %p117 = por %p115, %p116
      %p118 = scmp.ne.s32.totalorder %s107, %s108
      %p119 = scmp.eq.s32.totalorder %s36, 0
      %p120 = por %p118, %p119
      %p121 = scmp.ne.s32.totalorder %s107, %s108
      %p122 = scmp.eq.s32.totalorder %s37, 1
      %p123 = por %p121, %p122
      %p125 = scmp.ne.s32.totalorder %s108, %s124
      %p126 = scmp.eq.s32.totalorder %s37, 0
      %p127 = por %p125, %p126
      %s128 = ssub.s32 %s38, %s50
      %s129 = ssub.s32 %s39, %s46
      %s130 = sor.u32 %s128, %s129
      %p131 = scmp.eq.s32.totalorder %s130, 0
      %s133 = sadd.s32 %s132, 1
      %s134 = scalar_select %p131, %s132, %s133
      %p137 = pneg %p131
      %p138 = scmp.eq.s32.totalorder %s31, 1
      %p139 = por %p137, %p138
      %p140 = scmp.ne.s32.totalorder %s132, %s135
      %p141 = scmp.eq.s32.totalorder %s31, 0
      %p142 = por %p140, %p141
      %p143 = scmp.ne.s32.totalorder %s132, %s135
      %p144 = scmp.eq.s32.totalorder %s36, 1
      %p145 = por %p143, %p144
      %p146 = scmp.ne.s32.totalorder %s135, %s136
      %p147 = scmp.eq.s32.totalorder %s36, 0
      %p148 = por %p146, %p147
      %p149 = scmp.ne.s32.totalorder %s135, %s136
      %p150 = scmp.eq.s32.totalorder %s37, 1
      %p151 = por %p149, %p150
      %p153 = scmp.ne.s32.totalorder %s136, %s152
      %p154 = scmp.eq.s32.totalorder %s37, 0
      %p155 = por %p153, %p154
      %s157 = sadd.s32 %s156, 1
      %p160 = scmp.eq.s32.totalorder %s31, 1
      %p161 = scmp.ne.s32.totalorder %s156, %s158
      %p162 = scmp.eq.s32.totalorder %s31, 0
      %p163 = por %p161, %p162
      %p164 = scmp.ne.s32.totalorder %s156, %s158
      %p165 = scmp.eq.s32.totalorder %s36, 1
      %p166 = por %p164, %p165
      %p167 = scmp.ne.s32.totalorder %s158, %s159
      %p168 = scmp.eq.s32.totalorder %s36, 0
      %p169 = por %p167, %p168
      %p170 = scmp.ne.s32.totalorder %s158, %s159
      %p171 = scmp.eq.s32.totalorder %s37, 1
      %p172 = por %p170, %p171
      %p174 = scmp.ne.s32.totalorder %s159, %s173
      %p175 = scmp.eq.s32.totalorder %s37, 0
      %p176 = por %p174, %p175
      %s177 = ssub.s32 %s39, %s46
      %p178 = scmp.eq.s32.totalorder %s177, 0
      %s180 = sadd.s32 %s179, 1
      %s181 = scalar_select %p178, %s179, %s180
      %p184 = pneg %p178
      %p185 = scmp.eq.s32.totalorder %s31, 1
      %p186 = por %p184, %p185
      %p187 = scmp.ne.s32.totalorder %s179, %s182
      %p188 = scmp.eq.s32.totalorder %s31, 0
      %p189 = por %p187, %p188
      %p190 = scmp.ne.s32.totalorder %s179, %s182
      %p191 = scmp.eq.s32.totalorder %s36, 1
      %p192 = por %p190, %p191
      %p193 = scmp.ne.s32.totalorder %s182, %s183
      %p194 = scmp.eq.s32.totalorder %s36, 0
      %p195 = por %p193, %p194
      %p196 = scmp.ne.s32.totalorder %s182, %s183
      %p197 = scmp.eq.s32.totalorder %s37, 1
      %p198 = por %p196, %p197
      %p200 = scmp.ne.s32.totalorder %s183, %s199
      %p201 = scmp.eq.s32.totalorder %s37, 0
      %p202 = por %p200, %p201
      %s203 = ssub.s32 %s39, %s46
      %p204 = scmp.eq.s32.totalorder %s203, 0
      %s206 = sadd.s32 %s205, 1
      %s207 = scalar_select %p204, %s205, %s206
      %p210 = pneg %p204
      %p211 = scmp.eq.s32.totalorder %s31, 1
      %p212 = por %p210, %p211
      %p213 = scmp.ne.s32.totalorder %s205, %s208
      %p214 = scmp.eq.s32.totalorder %s31, 0
      %p215 = por %p213, %p214
      %p216 = scmp.ne.s32.totalorder %s205, %s208
      %p217 = scmp.eq.s32.totalorder %s36, 1
      %p218 = por %p216, %p217
      %p219 = scmp.ne.s32.totalorder %s208, %s209
      %p220 = scmp.eq.s32.totalorder %s36, 0
      %p221 = por %p219, %p220
      %p222 = scmp.ne.s32.totalorder %s208, %s209
      %p223 = scmp.eq.s32.totalorder %s37, 1
      %p224 = por %p222, %p223
      %p226 = scmp.ne.s32.totalorder %s209, %s225
      %p227 = scmp.eq.s32.totalorder %s37, 0
      %p228 = por %p226, %p227
      %s229 = ssub.s32 %s38, %s50
      %s230 = ssub.s32 %s39, %s46
      %s231 = sor.u32 %s229, %s230
      %p232 = scmp.eq.s32.totalorder %s231, 0
      %s234 = sadd.s32 %s233, 1
      %s235 = scalar_select %p232, %s233, %s234
      %p238 = pneg %p232
      %p239 = scmp.eq.s32.totalorder %s31, 1
      %p240 = por %p238, %p239
      %p241 = scmp.ne.s32.totalorder %s233, %s236
      %p242 = scmp.eq.s32.totalorder %s31, 0
      %p243 = por %p241, %p242
      %p244 = scmp.ne.s32.totalorder %s233, %s236
      %p245 = scmp.eq.s32.totalorder %s36, 1
      %p246 = por %p244, %p245
      %p247 = scmp.ne.s32.totalorder %s236, %s237
      %p248 = scmp.eq.s32.totalorder %s36, 0
      %p249 = por %p247, %p248
      %p250 = scmp.ne.s32.totalorder %s236, %s237
      %p251 = scmp.eq.s32.totalorder %s37, 1
      %p252 = por %p250, %p251
      %p254 = scmp.ne.s32.totalorder %s237, %s253
      %p255 = scmp.eq.s32.totalorder %s37, 0
      %p256 = por %p254, %p255
      %s257 = ssub.s32 %s38, %s50
      %s258 = ssub.s32 %s39, %s46
      %s259 = sor.u32 %s257, %s258
      %p260 = scmp.eq.s32.totalorder %s259, 0
      %s262 = sadd.s32 %s261, 1
      %s263 = scalar_select %p260, %s261, %s262
      %p266 = pneg %p260
      %p267 = scmp.eq.s32.totalorder %s31, 1
      %p268 = por %p266, %p267
      %p269 = scmp.ne.s32.totalorder %s261, %s264
      %p270 = scmp.eq.s32.totalorder %s31, 0
      %p271 = por %p269, %p270
      %p272 = scmp.ne.s32.totalorder %s261, %s264
      %p273 = scmp.eq.s32.totalorder %s36, 1
      %p274 = por %p272, %p273
      %p275 = scmp.ne.s32.totalorder %s264, %s265
      %p276 = scmp.eq.s32.totalorder %s36, 0
      %p277 = por %p275, %p276
      %p278 = scmp.ne.s32.totalorder %s264, %s265
      %p279 = scmp.eq.s32.totalorder %s37, 1
      %p280 = por %p278, %p279
      %p282 = scmp.ne.s32.totalorder %s265, %s281
      %p283 = scmp.eq.s32.totalorder %s37, 0
      %p284 = por %p282, %p283
      %s285 = ssub.s32 %s38, %s50
      %s286 = ssub.s32 %s39, %s46
      %s287 = sor.u32 %s285, %s286
      %p288 = scmp.eq.s32.totalorder %s287, 0
      %s290 = sadd.s32 %s289, 1
      %s291 = scalar_select %p288, %s289, %s290
      %p294 = pneg %p288
      %p295 = scmp.eq.s32.totalorder %s31, 1
      %p296 = por %p294, %p295
      %p297 = scmp.ne.s32.totalorder %s289, %s292
      %p298 = scmp.eq.s32.totalorder %s31, 0
      %p299 = por %p297, %p298
      %p300 = scmp.ne.s32.totalorder %s289, %s292
      %p301 = scmp.eq.s32.totalorder %s36, 1
      %p302 = por %p300, %p301
      %p303 = scmp.ne.s32.totalorder %s292, %s293
      %p304 = scmp.eq.s32.totalorder %s36, 0
      %p305 = por %p303, %p304
      %p306 = scmp.ne.s32.totalorder %s292, %s293
      %p307 = scmp.eq.s32.totalorder %s37, 1
      %p308 = por %p306, %p307
      %p310 = scmp.ne.s32.totalorder %s293, %s309
      %p311 = scmp.eq.s32.totalorder %s37, 0
      %p312 = por %p310, %p311
      %p313 = scmp.le.s32.totalorder 1, %s31
      %p314 = scmp.lt.s32.totalorder %s31, 3
      %p315 = pnand %p313, %p314
      %p316 = pneg %p315
      // Predicated region
      $region9: #{tpu_custom_call.1} parent=5 // pred_check
        _
      $region10: #{tpu_custom_call.1} parent=5 // pred_check_branch
        %318 = sbr.rel (%p315) target = $region12
      $region11: #{tpu_custom_call.1} parent=5 // pred_region
        %s319 = ssub.s32 %s31, 1
        // Predicated region
        $region13: #{tpu_custom_call.1} parent=11 // pred_check
          %p320 = pneg %p64
        $region14: #{tpu_custom_call.1} parent=11 // pred_check_branch
          %322 = sbr.rel (%p320) target = $region16
        $region15: #{tpu_custom_call.1} parent=11 // pred_region
          %s324 = ssub.s32 16, 16
          %325 = vsyncadd [#allocation5], %s324
          %328 = dma.hbm_to_smem %s0, 16, [#allocation2], [#allocation5]
        $region16: #{tpu_custom_call.1} parent=11 // pred_fallthru
          _
        // Predicated region
        $region17: #{tpu_custom_call.1} parent=11 // pred_check
          %p329 = pneg %p169
        $region18: #{tpu_custom_call.1} parent=11 // pred_check_branch
          %331 = sbr.rel (%p329) target = $region20
        $region19: #{tpu_custom_call.1} parent=11 // pred_region
          %s333 = ssub.s32 3072, 3072
          %334 = vsyncadd [#allocation11], %s333
          %s335 = sshll.u32 [#allocation10], 4
          %s336 = int_to_ptr.vmem [resolvable:$true] %s335
          %341 = dma.hbm_to_vmem [thread:$0]  %s4, 3072, %s336, [#allocation11], 192, 192, 12
        $region20: #{tpu_custom_call.1} parent=11 // pred_fallthru
          _
        // Predicated region
        $region21: #{tpu_custom_call.1} parent=11 // pred_check
          %p342 = pneg %p195
        $region22: #{tpu_custom_call.1} parent=11 // pred_check_branch
          %344 = sbr.rel (%p342) target = $region24
        $region23: #{tpu_custom_call.1} parent=11 // pred_region
          %s345 = smul.u32 2, %s41
          %s347 = ssub.s32 256, 256
          %348 = vsyncadd [#allocation11], %s347
          %s349 = smul.addr %s345, 128
          %s350 = scalar_lea.hbm %s5, %s349
          %s351 = sshll.u32 [#allocation12], 4
          %s352 = int_to_ptr.vmem [resolvable:$true] %s351
          %357 = dma.hbm_to_vmem [thread:$0]  %s350, 256, %s352, [#allocation11], 128, 128, 8
        $region24: #{tpu_custom_call.1} parent=11 // pred_fallthru
          _
        // Predicated region
        $region25: #{tpu_custom_call.1} parent=11 // pred_check
          %p358 = pneg %p221
        $region26: #{tpu_custom_call.1} parent=11 // pred_check_branch
          %360 = sbr.rel (%p358) target = $region28
        $region27: #{tpu_custom_call.1} parent=11 // pred_region
          %s361 = smul.u32 2, %s41
          %s363 = ssub.s32 256, 256
          %364 = vsyncadd [#allocation14], %s363
          %s365 = smul.addr %s361, 128
          %s366 = scalar_lea.hbm %s6, %s365
          %s367 = sshll.u32 [#allocation13], 4
          %s368 = int_to_ptr.vmem [resolvable:$true] %s367
          %373 = dma.hbm_to_vmem [thread:$0]  %s366, 256, %s368, [#allocation14], 128, 128, 8
        $region28: #{tpu_custom_call.1} parent=11 // pred_fallthru
          _
      $region12: #{tpu_custom_call.1} parent=5 // pred_fallthru
        _
      %p374 = scmp.lt.s32.totalorder %s31, 2
      // Predicated region
      $region29: #{tpu_custom_call.1} parent=5 // pred_check
        %p375 = pneg %p374
      $region30: #{tpu_custom_call.1} parent=5 // pred_check_branch
        %377 = sbr.rel (%p375) target = $region32
      $region31: #{tpu_custom_call.1} parent=5 // pred_region
        // Predicated region
        $region33: #{tpu_custom_call.1} parent=31 // pred_check
          %p378 = pneg %p86
        $region34: #{tpu_custom_call.1} parent=31 // pred_check_branch
          %380 = sbr.rel (%p378) target = $region36
        $region35: #{tpu_custom_call.1} parent=31 // pred_region
          %s381 = sand.u32 %s76, 1
          %s382 = scalar_lea.sflag [#allocation3], %s381
          %s383 = sand.u32 %s76, 1
          %s384 = smul.addr %s383, 16
          %s385 = scalar_lea.vmem [#allocation6], %s384
          %s386 = smul.u32 2, %s39
          %s388 = ssub.s32 256, 256
          %389 = vsyncadd %s382, %s388
          %s390 = smul.addr %s38, 2
          %s391 = sadd.s32 %s386, %s390
          %s392 = smul.addr %s391, 128
          %s393 = scalar_lea.hbm %s1, %s392
          %s394 = sshll.u32 %s385, 4
          %s395 = int_to_ptr.vmem [resolvable:$true] %s394
          %400 = dma.hbm_to_vmem [thread:$0]  %s393, 256, %s395, %s382, 128, 128, 8
        $region36: #{tpu_custom_call.1} parent=31 // pred_fallthru
          _
        // Predicated region
        $region37: #{tpu_custom_call.1} parent=31 // pred_check
          %p401 = pneg %p114
        $region38: #{tpu_custom_call.1} parent=31 // pred_check_branch
          %403 = sbr.rel (%p401) target = $region40
        $region39: #{tpu_custom_call.1} parent=31 // pred_region
          %s404 = sand.u32 %s31, 1
          %s405 = scalar_lea.sflag [#allocation8], %s404
          %s406 = sand.u32 %s104, 1
          %s407 = smul.addr %s406, 16
          %s408 = scalar_lea.vmem [#allocation7], %s407
          %s409 = smul.u32 2, %s39
          %s411 = ssub.s32 256, 256
          %412 = vsyncadd %s405, %s411
          %s413 = smul.addr %s38, 2
          %s414 = sadd.s32 %s409, %s413
          %s415 = smul.addr %s414, 128
          %s416 = scalar_lea.hbm %s2, %s415
          %s417 = sshll.u32 %s408, 4
          %s418 = int_to_ptr.vmem [resolvable:$true] %s417
          %423 = dma.hbm_to_vmem [thread:$0]  %s416, 256, %s418, %s405, 128, 128, 8
        $region40: #{tpu_custom_call.1} parent=31 // pred_fallthru
          _
        // Predicated region
        $region41: #{tpu_custom_call.1} parent=31 // pred_check
          %p424 = pneg %p142
        $region42: #{tpu_custom_call.1} parent=31 // pred_check_branch
          %426 = sbr.rel (%p424) target = $region44
        $region43: #{tpu_custom_call.1} parent=31 // pred_region
          %s427 = sand.u32 %s31, 1
          %s428 = scalar_lea.sflag [#allocation8], %s427
          %s429 = sand.u32 %s132, 1
          %s430 = smul.addr %s429, 16
          %s431 = scalar_lea.vmem [#allocation9], %s430
          %s432 = smul.u32 2, %s39
          %s434 = ssub.s32 256, 256
          %435 = vsyncadd %s428, %s434
          %s436 = smul.addr %s38, 2
          %s437 = sadd.s32 %s432, %s436
          %s438 = smul.addr %s437, 128
          %s439 = scalar_lea.hbm %s3, %s438
          %s440 = sshll.u32 %s431, 4
          %s441 = int_to_ptr.vmem [resolvable:$true] %s440
          %446 = dma.hbm_to_vmem [thread:$0]  %s439, 256, %s441, %s428, 128, 128, 8
        $region44: #{tpu_custom_call.1} parent=31 // pred_fallthru
          _
      $region32: #{tpu_custom_call.1} parent=5 // pred_fallthru
        _
      %p447 = scmp.le.s32.totalorder 1, %s31
      %p448 = scmp.lt.s32.totalorder %s31, 3
      %p449 = pnand %p447, %p448
      %p450 = pneg %p449
      // Predicated region
      $region45: #{tpu_custom_call.1} parent=5 // pred_check
        _
      $region46: #{tpu_custom_call.1} parent=5 // pred_check_branch
        %452 = sbr.rel (%p449) target = $region48
      $region47: #{tpu_custom_call.1} parent=5 // pred_region
        %s453 = ssub.s32 %s31, 1
        // Predicated region
        $region49: #{tpu_custom_call.1} parent=47 // pred_check
          %p454 = pneg %p64
        $region50: #{tpu_custom_call.1} parent=47 // pred_check_branch
          %456 = sbr.rel (%p454) target = $region52
        $region51: #{tpu_custom_call.1} parent=47 // pred_region
          %457 = dma.done [#allocation5], 16
        $region52: #{tpu_custom_call.1} parent=47 // pred_fallthru
          _
        %s458 = sand.u32 %s79, 1
        %s459 = scalar_lea.sflag [#allocation3], %s458
        %s460 = sand.u32 %s79, 1
        %s461 = smul.addr %s460, 16
        %s462 = scalar_lea.vmem [#allocation6], %s461
        // Predicated region
        $region53: #{tpu_custom_call.1} parent=47 // pred_check
          %p463 = pneg %p92
        $region54: #{tpu_custom_call.1} parent=47 // pred_check_branch
          %465 = sbr.rel (%p463) target = $region56
        $region55: #{tpu_custom_call.1} parent=47 // pred_region
          %466 = dma.done %s459, 256
        $region56: #{tpu_custom_call.1} parent=47 // pred_fallthru
          _
        %s467 = sand.u32 %s36, 1
        %s468 = scalar_lea.sflag [#allocation8], %s467
        %s469 = sand.u32 %s107, 1
        %s470 = smul.addr %s469, 16
        %s471 = scalar_lea.vmem [#allocation7], %s470
        // Predicated region
        $region57: #{tpu_custom_call.1} parent=47 // pred_check
          %p472 = pneg %p120
        $region58: #{tpu_custom_call.1} parent=47 // pred_check_branch
          %474 = sbr.rel (%p472) target = $region60
        $region59: #{tpu_custom_call.1} parent=47 // pred_region
          %475 = dma.done %s468, 256
        $region60: #{tpu_custom_call.1} parent=47 // pred_fallthru
          _
        %s476 = sand.u32 %s36, 1
        %s477 = scalar_lea.sflag [#allocation8], %s476
        %s478 = sand.u32 %s135, 1
        %s479 = smul.addr %s478, 16
        %s480 = scalar_lea.vmem [#allocation9], %s479
        // Predicated region
        $region61: #{tpu_custom_call.1} parent=47 // pred_check
          %p481 = pneg %p148
        $region62: #{tpu_custom_call.1} parent=47 // pred_check_branch
          %483 = sbr.rel (%p481) target = $region64
        $region63: #{tpu_custom_call.1} parent=47 // pred_region
          %484 = dma.done %s477, 256
        $region64: #{tpu_custom_call.1} parent=47 // pred_fallthru
          _
        // Predicated region
        $region65: #{tpu_custom_call.1} parent=47 // pred_check
          %p485 = pneg %p169
        $region66: #{tpu_custom_call.1} parent=47 // pred_check_branch
          %487 = sbr.rel (%p485) target = $region68
        $region67: #{tpu_custom_call.1} parent=47 // pred_region
          %488 = dma.done [#allocation11], 3072
        $region68: #{tpu_custom_call.1} parent=47 // pred_fallthru
          _
        // Predicated region
        $region69: #{tpu_custom_call.1} parent=47 // pred_check
          %p489 = pneg %p195
        $region70: #{tpu_custom_call.1} parent=47 // pred_check_branch
          %491 = sbr.rel (%p489) target = $region72
        $region71: #{tpu_custom_call.1} parent=47 // pred_region
          %492 = dma.done [#allocation11], 256
        $region72: #{tpu_custom_call.1} parent=47 // pred_fallthru
          _
        // Predicated region
        $region73: #{tpu_custom_call.1} parent=47 // pred_check
          %p493 = pneg %p221
        $region74: #{tpu_custom_call.1} parent=47 // pred_check_branch
          %495 = sbr.rel (%p493) target = $region76
        $region75: #{tpu_custom_call.1} parent=47 // pred_region
          %496 = dma.done [#allocation14], 256
        $region76: #{tpu_custom_call.1} parent=47 // pred_fallthru
          _
        %497 = sfence
        %p498 = pneg %p64
        %p499 = pneg %p61
        %s500 = sand.u32 %s79, 1
        %s501 = scalar_lea.sflag [#allocation3], %s500
        %s502 = sand.u32 %s79, 1
        %s503 = smul.addr %s502, 16
        %s504 = scalar_lea.vmem [#allocation6], %s503
        %p505 = pneg %p92
        %p506 = pneg %p89
        %s507 = sand.u32 %s36, 1
        %s508 = scalar_lea.sflag [#allocation8], %s507
        %s509 = sand.u32 %s107, 1
        %s510 = smul.addr %s509, 16
        %s511 = scalar_lea.vmem [#allocation7], %s510
        %p512 = pneg %p120
        %p513 = pneg %p117
        %s514 = sand.u32 %s36, 1
        %s515 = scalar_lea.sflag [#allocation8], %s514
        %s516 = sand.u32 %s135, 1
        %s517 = smul.addr %s516, 16
        %s518 = scalar_lea.vmem [#allocation9], %s517
        %p519 = pneg %p148
        %p520 = pneg %p145
        %p521 = pneg %p169
        %p522 = pneg %p166
        %p523 = pneg %p195
        %p524 = pneg %p192
        %p525 = pneg %p221
        %p526 = pneg %p218
        %p527 = pneg %p249
        %p528 = pneg %p246
        %s529 = sand.u32 %s236, 1
        %s530 = scalar_lea.sflag [#allocation4], %s529
        %s531 = sand.u32 %s236, 1
        %s532 = smul.addr %s531, 16
        %s533 = scalar_lea.vmem [#allocation15], %s532
        %p534 = pneg %p277
        %p535 = pneg %p274
        %s536 = sand.u32 %s36, 1
        %s537 = scalar_lea.sflag [#allocation17], %s536
        %s538 = sand.u32 %s264, 1
        %s539 = smul.addr %s538, 16
        %s540 = scalar_lea.vmem [#allocation16], %s539
        %p541 = pneg %p305
        %p542 = pneg %p302
        %s543 = sand.u32 %s36, 1
        %s544 = scalar_lea.sflag [#allocation17], %s543
        %s545 = sand.u32 %s292, 1
        %s546 = smul.addr %s545, 16
        %s547 = scalar_lea.vmem [#allocation18], %s546
        %s548 = smul.u32 2, %s41
        %s549 = smul.u32 2, %s41
        %s550 = smul.u32 2, %s41
        %s551 = smul.u32 2, %s41
        %s552 = smul.u32 2, %s41
        %s553 = smul.u32 2, %s41
        %s554 = smul.u32 2, %s41
        %s555 = smul.u32 2, %s41
        %v557 = vld [vmem:[%s480] sm:$0xff]
        %v558 = vld [vmem:[%s480 + $0x8] sm:$0xff]
        %s559 = sld [smem:[#allocation2]]
        %s560 = sld [smem:[#allocation2 + $0x1]]
        %s561 = sld [smem:[#allocation2 + $0x2]]
        %v562 = vld [vmem:[%s462] sm:$0xff]
        %v563 = vld [vmem:[%s462 + $0x8] sm:$0xff]
        %v564 = vstv %s559
        %v565 = vmul.f32 %v564, %v562
        %v566 = vmul.f32 %v564, %v563
        %v567 = vld [vmem:[%s471] sm:$0xff]
        %v568 = vld [vmem:[%s471 + $0x8] sm:$0xff]
        %v569 = vstv %s560
        %v570 = vmul.f32 %v569, %v567
        %v571 = vmul.f32 %v569, %v568
        %v572 = vadd.f32 %v565, %v570
        %v573 = vadd.f32 %v566, %v571
        %v574 = vmul.f32 %v572, %v572
        %v575 = vmul.f32 %v573, %v573
        %576 = vadd.xlane.f32.xlu0 %v574
        %v577 = vpop.xlane.xlu0 %576
        %578 = vadd.xlane.f32.xlu0 %v575
        %v579 = vpop.xlane.xlu0 %578
        %v580 = vrcp.pop 128.0
        %v581 = vmul.f32 %v577, %v580
        %v582 = vmul.f32 %v579, %v580
        %v583 = vadd.f32 %v581, 1.1920929e-07
        %v584 = vadd.f32 %v582, 1.1920929e-07
        %v585 = vrsqrt.pop %v583
        %v586 = vrsqrt.pop %v584
        %v587 = vmul.f32 %v572, %v585
        %v588 = vmul.f32 %v573, %v586
        %v589 = vpack.c.bf16 %v588, %v587
        %v590 = vld [vmem:[#allocation10] sm:$0xff]
        %v591 = vld [vmem:[#allocation10 + $0x8] sm:$0xf]
        %v592 = vld [vmem:[#allocation10 + $0xc] sm:$0xff]
        %v593 = vld [vmem:[#allocation10 + $0x14] sm:$0xf]
        %v594 = vld [vmem:[#allocation10 + $0x18] sm:$0xff]
        %v595 = vld [vmem:[#allocation10 + $0x20] sm:$0xf]
        %v596 = vld [vmem:[#allocation10 + $0x24] sm:$0xff]
        %v597 = vld [vmem:[#allocation10 + $0x2c] sm:$0xf]
        %v598 = vld [vmem:[#allocation10 + $0x30] sm:$0xff]
        %v599 = vld [vmem:[#allocation10 + $0x38] sm:$0xf]
        %v600 = vld [vmem:[#allocation10 + $0x3c] sm:$0xff]
        %v601 = vld [vmem:[#allocation10 + $0x44] sm:$0xf]
        %v602 = vld [vmem:[#allocation10 + $0x48] sm:$0xff]
        %v603 = vld [vmem:[#allocation10 + $0x50] sm:$0xf]
        %v604 = vld [vmem:[#allocation10 + $0x54] sm:$0xff]
        %v605 = vld [vmem:[#allocation10 + $0x5c] sm:$0xf]
        %v606 = vld [vmem:[#allocation10 + $0x60] sm:$0xff]
        %v607 = vld [vmem:[#allocation10 + $0x68] sm:$0xf]
        %v608 = vld [vmem:[#allocation10 + $0x6c] sm:$0xff]
        %v609 = vld [vmem:[#allocation10 + $0x74] sm:$0xf]
        %v610 = vld [vmem:[#allocation10 + $0x78] sm:$0xff]
        %v611 = vld [vmem:[#allocation10 + $0x80] sm:$0xf]
        %v612 = vld [vmem:[#allocation10 + $0x84] sm:$0xff]
        %v613 = vld [vmem:[#allocation10 + $0x8c] sm:$0xf]
        %v614 = vld [vmem:[#allocation10 + $0x90] sm:$0xff]
        %v615 = vld [vmem:[#allocation10 + $0x98] sm:$0xf]
        %v616 = vld [vmem:[#allocation10 + $0x9c] sm:$0xff]
        %v617 = vld [vmem:[#allocation10 + $0xa4] sm:$0xf]
        %v618 = vld [vmem:[#allocation10 + $0xa8] sm:$0xff]
        %v619 = vld [vmem:[#allocation10 + $0xb0] sm:$0xf]
        %v620 = vld [vmem:[#allocation10 + $0xb4] sm:$0xff]
        %v621 = vld [vmem:[#allocation10 + $0xbc] sm:$0xf]
        %v654 = vunpack.c.l.b16 %v590
        %v655 = vunpack.c.h.b16 %v590
        %v656 = vunpack.c.l.b16 %v591
        %v657 = vunpack.c.l.b16 %v592
        %v658 = vunpack.c.h.b16 %v592
        %v659 = vunpack.c.l.b16 %v593
        %v660 = vunpack.c.l.b16 %v594
        %v661 = vunpack.c.h.b16 %v594
        %v662 = vunpack.c.l.b16 %v595
        %v663 = vunpack.c.l.b16 %v596
        %v664 = vunpack.c.h.b16 %v596
        %v665 = vunpack.c.l.b16 %v597
        %v666 = vunpack.c.l.b16 %v598
        %v667 = vunpack.c.h.b16 %v598
        %v668 = vunpack.c.l.b16 %v599
        %v669 = vunpack.c.l.b16 %v600
        %v670 = vunpack.c.h.b16 %v600
        %v671 = vunpack.c.l.b16 %v601
        %v672 = vunpack.c.l.b16 %v602
        %v673 = vunpack.c.h.b16 %v602
        %v674 = vunpack.c.l.b16 %v603
        %v675 = vunpack.c.l.b16 %v604
        %v676 = vunpack.c.h.b16 %v604
        %v677 = vunpack.c.l.b16 %v605
        %v678 = vunpack.c.l.b16 %v606
        %v679 = vunpack.c.h.b16 %v606
        %v680 = vunpack.c.l.b16 %v607
        %v681 = vunpack.c.l.b16 %v608
        %v682 = vunpack.c.h.b16 %v608
        %v683 = vunpack.c.l.b16 %v609
        %v684 = vunpack.c.l.b16 %v610
        %v685 = vunpack.c.h.b16 %v610
        %v686 = vunpack.c.l.b16 %v611
        %v687 = vunpack.c.l.b16 %v612
        %v688 = vunpack.c.h.b16 %v612
        %v689 = vunpack.c.l.b16 %v613
        %v690 = vunpack.c.l.b16 %v614
        %v691 = vunpack.c.h.b16 %v614
        %v692 = vunpack.c.l.b16 %v615
        %v693 = vunpack.c.l.b16 %v616
        %v694 = vunpack.c.h.b16 %v616
        %v695 = vunpack.c.l.b16 %v617
        %v696 = vunpack.c.l.b16 %v618
        %v697 = vunpack.c.h.b16 %v618
        %v698 = vunpack.c.l.b16 %v619
        %v699 = vunpack.c.l.b16 %v620
        %v700 = vunpack.c.h.b16 %v620
        %v701 = vunpack.c.l.b16 %v621
        %v702 = vpack.c.b16 %v657, %v654
        %v703 = vpack.c.b16 %v658, %v655
        %v704 = vpack.c.b16 %v659, %v656
        %v705 = vpack.c.b16 %v663, %v660
        %v706 = vpack.c.b16 %v664, %v661
        %v707 = vpack.c.b16 %v665, %v662
        %v708 = vpack.c.b16 %v669, %v666
        %v709 = vpack.c.b16 %v670, %v667
        %v710 = vpack.c.b16 %v671, %v668
        %v711 = vpack.c.b16 %v675, %v672
        %v712 = vpack.c.b16 %v676, %v673
        %v713 = vpack.c.b16 %v677, %v674
        %v714 = vpack.c.b16 %v681, %v678
        %v715 = vpack.c.b16 %v682, %v679
        %v716 = vpack.c.b16 %v683, %v680
        %v717 = vpack.c.b16 %v687, %v684
        %v718 = vpack.c.b16 %v688, %v685
        %v719 = vpack.c.b16 %v689, %v686
        %v720 = vpack.c.b16 %v693, %v690
        %v721 = vpack.c.b16 %v694, %v691
        %v722 = vpack.c.b16 %v695, %v692
        %v723 = vpack.c.b16 %v699, %v696
        %v724 = vpack.c.b16 %v700, %v697
        %v725 = vpack.c.b16 %v701, %v698
        %750 = vmatprep.subr.bf16.mxu0 %v703
        %751 = vmatpush1.bf16.msra.mxu0 %v702
        %752 = vmatprep.subr.bf16.mxu0 %v706
        %753 = vmatpush1.bf16.msra.mxu0 %v705
        %754 = vmatprep.subr.bf16.mxu0 %v709
        %755 = vmatpush1.bf16.msra.mxu0 %v708
        %756 = vmatprep.subr.bf16.mxu0 %v712
        %757 = vmatpush1.bf16.msra.mxu0 %v711
        %758 = vmatprep.subr.bf16.mxu0 %v715
        %759 = vmatpush1.bf16.msra.mxu0 %v714
        %760 = vmatprep.subr.bf16.mxu0 %v718
        %761 = vmatpush1.bf16.msra.mxu0 %v717
        %762 = vmatprep.subr.bf16.mxu0 %v721
        %763 = vmatpush1.bf16.msra.mxu0 %v720
        %764 = vmatprep.subr.bf16.mxu0 %v724
        %765 = vmatpush1.bf16.msra.mxu0 %v723
        %766 = vmatprep.subr.bf16.mxu0 0
        %767 = vmatpush1.bf16.msra.mxu0 0
        %768 = vmatprep.subr.bf16.mxu0 0
        %769 = vmatpush1.bf16.msra.mxu0 0
        %770 = vmatprep.subr.bf16.mxu0 0
        %771 = vmatpush1.bf16.msra.mxu0 0
        %772 = vmatprep.subr.bf16.mxu0 0
        %773 = vmatpush1.bf16.msra.mxu0 0
        %774 = vmatprep.subr.bf16.mxu0 0
        %775 = vmatpush1.bf16.msra.mxu0 0
        %776 = vmatprep.subr.bf16.mxu0 0
        %777 = vmatpush1.bf16.msra.mxu0 0
        %778 = vmatprep.subr.bf16.mxu0 0
        %779 = vmatpush1.bf16.msra.mxu0 0
        %780 = vmatprep.subr.bf16.mxu0 0
        %781 = vmatpush1.bf16.msra.mxu0 0
        %782 = vmatprep.mubr.bf16.mxu0 0
        %783 = vmatmul.mubr.bf16.gmra.mrb[0].mxu0 %v589
        %v784 = vpop.f32.mrb[0].mxu0
        %v785 = vadd.f32 0.0, %v784
        %v786 = vpop.f32.mrb[0].mxu0
        %v787 = vadd.f32 0.0, %v786
        %v788 = vpop.f32.mrb[0].mxu0
        %v789 = vadd.f32 0.0, %v788
        %v790 = vpop.f32.mrb[0].mxu0
        %v791 = vadd.f32 0.0, %v790
        %792 = vdwg.mxu0
        %793 = vmatprep.subr.bf16.mxu0 0
        %794 = vmatpush1.bf16.msra.mxu0 %v704
        %795 = vmatprep.subr.bf16.mxu0 0
        %796 = vmatpush1.bf16.msra.mxu0 %v707
        %797 = vmatprep.subr.bf16.mxu0 0
        %798 = vmatpush1.bf16.msra.mxu0 %v710
        %799 = vmatprep.subr.bf16.mxu0 0
        %800 = vmatpush1.bf16.msra.mxu0 %v713
        %801 = vmatprep.subr.bf16.mxu0 0
        %802 = vmatpush1.bf16.msra.mxu0 %v716
        %803 = vmatprep.subr.bf16.mxu0 0
        %804 = vmatpush1.bf16.msra.mxu0 %v719
        %805 = vmatprep.subr.bf16.mxu0 0
        %806 = vmatpush1.bf16.msra.mxu0 %v722
        %807 = vmatprep.subr.bf16.mxu0 0
        %808 = vmatpush1.bf16.msra.mxu0 %v725
        %809 = vmatprep.subr.bf16.mxu0 0
        %810 = vmatpush1.bf16.msra.mxu0 0
        %811 = vmatprep.subr.bf16.mxu0 0
        %812 = vmatpush1.bf16.msra.mxu0 0
        %813 = vmatprep.subr.bf16.mxu0 0
        %814 = vmatpush1.bf16.msra.mxu0 0
        %815 = vmatprep.subr.bf16.mxu0 0
        %816 = vmatpush1.bf16.msra.mxu0 0
        %817 = vmatprep.subr.bf16.mxu0 0
        %818 = vmatpush1.bf16.msra.mxu0 0
        %819 = vmatprep.subr.bf16.mxu0 0
        %820 = vmatpush1.bf16.msra.mxu0 0
        %821 = vmatprep.subr.bf16.mxu0 0
        %822 = vmatpush1.bf16.msra.mxu0 0
        %823 = vmatprep.subr.bf16.mxu0 0
        %824 = vmatpush1.bf16.msra.mxu0 0
        %825 = vmatprep.mubr.bf16.mxu0 0
        %826 = vmatmul.mubr.bf16.gmra.mrb[0].mxu0 %v589
        %v827 = vpop.f32.mrb[0].mxu0
        %v828 = vadd.f32 0.0, %v827
        %v829 = vpop.f32.mrb[0].mxu0
        %v830 = vpop.f32.mrb[0].mxu0
        %v831 = vadd.f32 0.0, %v830
        %v832 = vpop.f32.mrb[0].mxu0
        %833 = vdwg.mxu0
        %s834 = ssub.f32 1.0, %s561
        %v835 = vstv %s834
        %v836 = vmul.f32 %v835, %v828
        %v837 = vmul.f32 %v835, %v831
        %v838 = vstv %s561
        %v839 = vmul.f32 %v838, %v557
        %v840 = vmul.f32 %v838, %v558
        %v841 = vadd.f32 %v836, %v839
        %v842 = vadd.f32 %v837, %v840
        %845 = vrot.lane.b32.xlu0 %v785, 64
        %v846 = vpop.permute.xlu0 %845
        %847 = vrot.lane.b32.xlu0 %v789, 64
        %v848 = vpop.permute.xlu0 %847
        %v851 = vmul.f32 %v785, %v785
        %v852 = vmul.f32 %v789, %v789
        %v853 = vmul.f32 %v846, %v846
        %v854 = vmul.f32 %v848, %v848
        %vm855 = vcmask 523264
        %v856 = vsel %vm855, %v851, 0.0
        %857 = vadd.xlane.f32.xlu0 %v856
        %v858 = vpop.xlane.xlu0 %857
        %v859 = vsel %vm855, %v852, 0.0
        %860 = vadd.xlane.f32.xlu0 %v859
        %v861 = vpop.xlane.xlu0 %860
        %v862 = vsel %vm855, %v853, 0.0
        %863 = vadd.xlane.f32.xlu0 %v862
        %v864 = vpop.xlane.xlu0 %863
        %v865 = vsel %vm855, %v854, 0.0
        %866 = vadd.xlane.f32.xlu0 %v865
        %v867 = vpop.xlane.xlu0 %866
        %v868 = vrcp.pop 64.0
        %v869 = vmul.f32 %v858, %v868
        %v870 = vmul.f32 %v861, %v868
        %v871 = vmul.f32 %v864, %v868
        %v872 = vmul.f32 %v867, %v868
        %v873 = vadd.f32 %v869, 1.1920929e-07
        %v874 = vadd.f32 %v870, 1.1920929e-07
        %v875 = vadd.f32 %v871, 1.1920929e-07
        %v876 = vadd.f32 %v872, 1.1920929e-07
        %v877 = vrsqrt.pop %v873
        %v878 = vrsqrt.pop %v874
        %v879 = vrsqrt.pop %v875
        %v880 = vrsqrt.pop %v876
        %v881 = vmul.f32 %v785, %v877
        %v882 = vmul.f32 %v789, %v878
        %v883 = vmul.f32 %v846, %v879
        %v884 = vmul.f32 %v848, %v880
        %887 = vrot.lane.b32.xlu0 %v787, 64
        %v888 = vpop.permute.xlu0 %887
        %889 = vrot.lane.b32.xlu0 %v791, 64
        %v890 = vpop.permute.xlu0 %889
        %v893 = vmul.f32 %v787, %v787
        %v894 = vmul.f32 %v791, %v791
        %v895 = vmul.f32 %v888, %v888
        %v896 = vmul.f32 %v890, %v890
        %v897 = vsel %vm855, %v893, 0.0
        %898 = vadd.xlane.f32.xlu0 %v897
        %v899 = vpop.xlane.xlu0 %898
        %v900 = vsel %vm855, %v894, 0.0
        %901 = vadd.xlane.f32.xlu0 %v900
        %v902 = vpop.xlane.xlu0 %901
        %v903 = vsel %vm855, %v895, 0.0
        %904 = vadd.xlane.f32.xlu0 %v903
        %v905 = vpop.xlane.xlu0 %904
        %v906 = vsel %vm855, %v896, 0.0
        %907 = vadd.xlane.f32.xlu0 %v906
        %v908 = vpop.xlane.xlu0 %907
        %v909 = vmul.f32 %v899, %v868
        %v910 = vmul.f32 %v902, %v868
        %v911 = vmul.f32 %v905, %v868
        %v912 = vmul.f32 %v908, %v868
        %v913 = vadd.f32 %v909, 1.1920929e-07
        %v914 = vadd.f32 %v910, 1.1920929e-07
        %v915 = vadd.f32 %v911, 1.1920929e-07
        %v916 = vadd.f32 %v912, 1.1920929e-07
        %v917 = vrsqrt.pop %v913
        %v918 = vrsqrt.pop %v914
        %v919 = vrsqrt.pop %v915
        %v920 = vrsqrt.pop %v916
        %v921 = vmul.f32 %v787, %v917
        %v922 = vmul.f32 %v791, %v918
        %v923 = vmul.f32 %v888, %v919
        %v924 = vmul.f32 %v890, %v920
        %v925 = vld [vmem:[#allocation12] sm:$0xff]
        %v926 = vld [vmem:[#allocation12 + $0x8] sm:$0xff]
        %v927 = vld [vmem:[#allocation13] sm:$0xff]
        %v928 = vld [vmem:[#allocation13 + $0x8] sm:$0xff]
        %933 = vrot.lane.b32.xlu0 %v881, 96
        %v934 = vpop.permute.xlu0 %933
        %935 = vrot.lane.b32.xlu0 %v882, 96
        %v936 = vpop.permute.xlu0 %935
        %937 = vrot.lane.b32.xlu0 %v883, 96
        %v938 = vpop.permute.xlu0 %937
        %939 = vrot.lane.b32.xlu0 %v884, 96
        %v940 = vpop.permute.xlu0 %939
        %945 = vrot.lane.b32.xlu0 %v881, 32
        %v946 = vpop.permute.xlu0 %945
        %947 = vrot.lane.b32.xlu0 %v882, 32
        %v948 = vpop.permute.xlu0 %947
        %949 = vrot.lane.b32.xlu0 %v883, 32
        %v950 = vpop.permute.xlu0 %949
        %951 = vrot.lane.b32.xlu0 %v884, 32
        %v952 = vpop.permute.xlu0 %951
        %vm957 = vcmask 261120
        %v958 = vsel %vm957, %v934, %v946
        %v959 = vsel %vm957, %v936, %v948
        %v960 = vsel %vm957, %v938, %v950
        %v961 = vsel %vm957, %v940, %v952
        %v962 = vmul.f32 %v881, %v925
        %v963 = vmul.f32 %v882, %v926
        %v964 = vmul.f32 %v883, %v925
        %v965 = vmul.f32 %v884, %v926
        %v966 = vmul.f32 %v958, %v927
        %v967 = vmul.f32 %v959, %v928
        %v968 = vmul.f32 %v960, %v927
        %v969 = vmul.f32 %v961, %v928
        %v970 = vadd.f32 %v962, %v966
        %v971 = vadd.f32 %v963, %v967
        %v972 = vadd.f32 %v964, %v968
        %v973 = vadd.f32 %v965, %v969
        %v974 = vpack.c.bf16 %v971, %v970
        %v975 = vpack.c.bf16 %v973, %v972
        %v978 = vunpack.c.l.b16 %v974
        %v979 = vunpack.c.h.b16 %v974
        %v980 = vunpack.c.l.b16 %v975
        %v981 = vunpack.c.h.b16 %v975
        %v982 = vpack.c.b16 %v978, %v978
        %v983 = vpack.c.b16 %v979, %v979
        %v984 = vpack.c.b16 %v980, %v980
        %v985 = vpack.c.b16 %v981, %v981
        %vm990 = vcmask 519168
        %991 = vst.msk [vmem:[%s533] sm:$0xf] %vm990, %v982
        %992 = vst.msk [vmem:[%s533 + $0x4] sm:$0xf] %vm990, %v983
        %993 = vst.msk [vmem:[%s533 + $0x8] sm:$0xf] %vm990, %v984
        %994 = vst.msk [vmem:[%s533 + $0xc] sm:$0xf] %vm990, %v985
        %999 = vrot.lane.b32.xlu0 %v921, 96
        %v1000 = vpop.permute.xlu0 %999
        %1001 = vrot.lane.b32.xlu0 %v922, 96
        %v1002 = vpop.permute.xlu0 %1001
        %1003 = vrot.lane.b32.xlu0 %v923, 96
        %v1004 = vpop.permute.xlu0 %1003
        %1005 = vrot.lane.b32.xlu0 %v924, 96
        %v1006 = vpop.permute.xlu0 %1005
        %1011 = vrot.lane.b32.xlu0 %v921, 32
        %v1012 = vpop.permute.xlu0 %1011
        %1013 = vrot.lane.b32.xlu0 %v922, 32
        %v1014 = vpop.permute.xlu0 %1013
        %1015 = vrot.lane.b32.xlu0 %v923, 32
        %v1016 = vpop.permute.xlu0 %1015
        %1017 = vrot.lane.b32.xlu0 %v924, 32
        %v1018 = vpop.permute.xlu0 %1017
        %v1023 = vsel %vm957, %v1000, %v1012
        %v1024 = vsel %vm957, %v1002, %v1014
        %v1025 = vsel %vm957, %v1004, %v1016
        %v1026 = vsel %vm957, %v1006, %v1018
        %v1027 = vmul.f32 %v921, %v925
        %v1028 = vmul.f32 %v922, %v926
        %v1029 = vmul.f32 %v923, %v925
        %v1030 = vmul.f32 %v924, %v926
        %v1031 = vmul.f32 %v1023, %v927
        %v1032 = vmul.f32 %v1024, %v928
        %v1033 = vmul.f32 %v1025, %v927
        %v1034 = vmul.f32 %v1026, %v928
        %v1035 = vadd.f32 %v1027, %v1031
        %v1036 = vadd.f32 %v1028, %v1032
        %v1037 = vadd.f32 %v1029, %v1033
        %v1038 = vadd.f32 %v1030, %v1034
        %v1039 = vpack.c.bf16 %v1036, %v1035
        %v1040 = vpack.c.bf16 %v1038, %v1037
        %v1043 = vunpack.c.l.b16 %v1039
        %v1044 = vunpack.c.h.b16 %v1039
        %v1045 = vunpack.c.l.b16 %v1040
        %v1046 = vunpack.c.h.b16 %v1040
        %v1047 = vpack.c.b16 %v1043, %v1043
        %v1048 = vpack.c.b16 %v1044, %v1044
        %v1049 = vpack.c.b16 %v1045, %v1045
        %v1050 = vpack.c.b16 %v1046, %v1046
        %1055 = vst.msk [vmem:[%s540] sm:$0xf] %vm990, %v1047
        %1056 = vst.msk [vmem:[%s540 + $0x4] sm:$0xf] %vm990, %v1048
        %1057 = vst.msk [vmem:[%s540 + $0x8] sm:$0xf] %vm990, %v1049
        %1058 = vst.msk [vmem:[%s540 + $0xc] sm:$0xf] %vm990, %v1050
        %1061 = vrot.lane.b32.xlu0 %v841, 64
        %v1062 = vpop.permute.xlu0 %1061
        %1063 = vrot.lane.b32.xlu0 %v842, 64
        %v1064 = vpop.permute.xlu0 %1063
        %v1067 = vpack.c.bf16 %v842, %v841
        %v1068 = vpack.c.bf16 %v1064, %v1062
        %v1071 = vunpack.c.l.b16 %v1067
        %v1072 = vunpack.c.h.b16 %v1067
        %v1073 = vunpack.c.l.b16 %v1068
        %v1074 = vunpack.c.h.b16 %v1068
        %v1075 = vpack.c.b16 %v1071, %v1071
        %v1076 = vpack.c.b16 %v1072, %v1072
        %v1077 = vpack.c.b16 %v1073, %v1073
        %v1078 = vpack.c.b16 %v1074, %v1074
        %1083 = vst.msk [vmem:[%s547] sm:$0xf] %vm990, %v1075
        %1084 = vst.msk [vmem:[%s547 + $0x4] sm:$0xf] %vm990, %v1076
        %1085 = vst.msk [vmem:[%s547 + $0x8] sm:$0xf] %vm990, %v1077
        %1086 = vst.msk [vmem:[%s547 + $0xc] sm:$0xf] %vm990, %v1078
        %s1087 = sand.u32 %s236, 1
        %s1088 = scalar_lea.sflag [#allocation4], %s1087
        %s1089 = sand.u32 %s236, 1
        %s1090 = smul.addr %s1089, 16
        %s1091 = scalar_lea.vmem [#allocation15], %s1090
        %s1092 = sand.u32 %s36, 1
        %s1093 = scalar_lea.sflag [#allocation17], %s1092
        %s1094 = sand.u32 %s264, 1
        %s1095 = smul.addr %s1094, 16
        %s1096 = scalar_lea.vmem [#allocation16], %s1095
        %s1097 = sand.u32 %s36, 1
        %s1098 = scalar_lea.sflag [#allocation17], %s1097
        %s1099 = sand.u32 %s292, 1
        %s1100 = smul.addr %s1099, 16
        %s1101 = scalar_lea.vmem [#allocation18], %s1100
        // Predicated region
        $region77: #{tpu_custom_call.1} parent=47 // pred_check
          %p1102 = pneg %p246
        $region78: #{tpu_custom_call.1} parent=47 // pred_check_branch
          %1104 = sbr.rel (%p1102) target = $region80
        $region79: #{tpu_custom_call.1} parent=47 // pred_region
          %s1105 = smul.u32 2, %s41
          %s1107 = ssub.s32 256, 256
          %1108 = vsyncadd %s1088, %s1107
          %s1109 = smul.addr %s40, 4
          %s1110 = sadd.s32 %s1105, %s1109
          %s1111 = smul.addr %s1110, 64
          %s1112 = scalar_lea.hbm %s7, %s1111
          %s1113 = sshll.u32 %s1091, 4
          %s1114 = int_to_ptr.vmem [resolvable:$true] %s1113
          %1119 = dma.vmem_to_hbm [thread:$0]  %s1114, 256, %s1112, %s1088, 64, 64, 4
        $region80: #{tpu_custom_call.1} parent=47 // pred_fallthru
          _
        // Predicated region
        $region81: #{tpu_custom_call.1} parent=47 // pred_check
          %p1120 = pneg %p274
        $region82: #{tpu_custom_call.1} parent=47 // pred_check_branch
          %1122 = sbr.rel (%p1120) target = $region84
        $region83: #{tpu_custom_call.1} parent=47 // pred_region
          %s1123 = smul.u32 2, %s41
          %s1125 = ssub.s32 256, 256
          %1126 = vsyncadd %s1093, %s1125
          %s1127 = smul.addr %s40, 4
          %s1128 = sadd.s32 %s1123, %s1127
          %s1129 = smul.addr %s1128, 64
          %s1130 = scalar_lea.hbm %s8, %s1129
          %s1131 = sshll.u32 %s1096, 4
          %s1132 = int_to_ptr.vmem [resolvable:$true] %s1131
          %1137 = dma.vmem_to_hbm [thread:$0]  %s1132, 256, %s1130, %s1093, 64, 64, 4
        $region84: #{tpu_custom_call.1} parent=47 // pred_fallthru
          _
        // Predicated region
        $region85: #{tpu_custom_call.1} parent=47 // pred_check
          %p1138 = pneg %p302
        $region86: #{tpu_custom_call.1} parent=47 // pred_check_branch
          %1140 = sbr.rel (%p1138) target = $region88
        $region87: #{tpu_custom_call.1} parent=47 // pred_region
          %s1141 = smul.u32 2, %s41
          %s1143 = ssub.s32 256, 256
          %1144 = vsyncadd %s1098, %s1143
          %s1145 = smul.addr %s40, 4
          %s1146 = sadd.s32 %s1141, %s1145
          %s1147 = smul.addr %s1146, 64
          %s1148 = scalar_lea.hbm %s9, %s1147
          %s1149 = sshll.u32 %s1101, 4
          %s1150 = int_to_ptr.vmem [resolvable:$true] %s1149
          %1155 = dma.vmem_to_hbm [thread:$0]  %s1150, 256, %s1148, %s1098, 64, 64, 4
        $region88: #{tpu_custom_call.1} parent=47 // pred_fallthru
          _
      $region48: #{tpu_custom_call.1} parent=5 // pred_fallthru
        _
      %p1156 = scmp.le.s32.totalorder 2, %s31
      // Predicated region
      $region89: #{tpu_custom_call.1} parent=5 // pred_check
        %p1157 = pneg %p1156
      $region90: #{tpu_custom_call.1} parent=5 // pred_check_branch
        %1159 = sbr.rel (%p1157) target = $region92
      $region91: #{tpu_custom_call.1} parent=5 // pred_region
        %s1160 = ssub.s32 %s31, 2
        // Predicated region
        $region93: #{tpu_custom_call.1} parent=91 // pred_check
          %p1161 = pneg %p252
        $region94: #{tpu_custom_call.1} parent=91 // pred_check_branch
          %1163 = sbr.rel (%p1161) target = $region96
        $region95: #{tpu_custom_call.1} parent=91 // pred_region
          %s1164 = sand.u32 %s237, 1
          %s1165 = scalar_lea.sflag [#allocation4], %s1164
          %s1166 = sand.u32 %s237, 1
          %s1167 = smul.addr %s1166, 16
          %s1168 = scalar_lea.vmem [#allocation15], %s1167
          %1169 = dma.done %s1165, 256
        $region96: #{tpu_custom_call.1} parent=91 // pred_fallthru
          _
        // Predicated region
        $region97: #{tpu_custom_call.1} parent=91 // pred_check
          %p1170 = pneg %p280
        $region98: #{tpu_custom_call.1} parent=91 // pred_check_branch
          %1172 = sbr.rel (%p1170) target = $region100
        $region99: #{tpu_custom_call.1} parent=91 // pred_region
          %s1173 = sand.u32 %s37, 1
          %s1174 = scalar_lea.sflag [#allocation17], %s1173
          %s1175 = sand.u32 %s265, 1
          %s1176 = smul.addr %s1175, 16
          %s1177 = scalar_lea.vmem [#allocation16], %s1176
          %1178 = dma.done %s1174, 256
        $region100: #{tpu_custom_call.1} parent=91 // pred_fallthru
          _
        // Predicated region
        $region101: #{tpu_custom_call.1} parent=91 // pred_check
          %p1179 = pneg %p308
        $region102: #{tpu_custom_call.1} parent=91 // pred_check_branch
          %1181 = sbr.rel (%p1179) target = $region104
        $region103: #{tpu_custom_call.1} parent=91 // pred_region
          %s1182 = sand.u32 %s37, 1
          %s1183 = scalar_lea.sflag [#allocation17], %s1182
          %s1184 = sand.u32 %s293, 1
          %s1185 = smul.addr %s1184, 16
          %s1186 = scalar_lea.vmem [#allocation18], %s1185
          %1187 = dma.done %s1183, 256
        $region104: #{tpu_custom_call.1} parent=91 // pred_fallthru
          _
      $region92: #{tpu_custom_call.1} parent=5 // pred_fallthru
        _
    $region6: #{tpu_custom_call.1} parent=1 // loop_footer
      %s35 = sadd.s32 1, %s31
    $region7: #{tpu_custom_call.1} parent=1 // loop_footer_branch
      %30 = sbr.rel target = $region3
    $region8: #{tpu_custom_call.1} parent=1 // loop_exit
      _
    %1188 = vsyncpa [#allocation3], 1
    %s1189 = scalar_lea.sflag [#allocation3], 1
    %1190 = vsyncpa %s1189, 1
    %1191 = vsyncpa [#allocation8], 1
    %s1192 = scalar_lea.sflag [#allocation8], 1
    %1193 = vsyncpa %s1192, 1
    %1194 = vsyncpa [#allocation11], 1
    %1195 = vsyncpa [#allocation14], 1
    %1196 = vsyncpa [#allocation4], 1
    %s1197 = scalar_lea.sflag [#allocation4], 1
    %1198 = vsyncpa %s1197, 1
    %1199 = vsyncpa [#allocation17], 1
    %s1200 = scalar_lea.sflag [#allocation17], 1
    %1201 = vsyncpa %s1200, 1
    %1202 = vsyncpa [#allocation5], 1
    %s1203 = scalar_lea.sflag [#allocation5], 1
    %1204 = vsyncpa %s1203, 1

// kernel: tpu_custom_call.1
$region0: #{tpu_custom_call.1}
  #allocation0 [shape = 'u32[]', space=smem, size = 0x4, offset = 0x4, fixed_abs, tag = 'smem constant byte address 0x4 - core index']
  #allocation1 [shape = 'u32[144,128]{1,0:T(1,128)}', space=vmem, size = 0x12000, scoped, tag = 'internal scratch']
  %s0 = inlined_call_operand.hbm [shape: f32[3], index: 0, kind: input, shape index: {}]
  %s1 = inlined_call_operand.hbm [shape: f32[2,16,128], index: 1, kind: input, shape index: {}]
  %s2 = inlined_call_operand.hbm [shape: f32[2,16,128], index: 2, kind: input, shape index: {}]
  %s3 = inlined_call_operand.hbm [shape: f32[2,16,128], index: 3, kind: input, shape index: {}]
  %s4 = inlined_call_operand.hbm [shape: bf16[128,384], index: 4, kind: input, shape index: {}]
  %s5 = inlined_call_operand.hbm [shape: f32[16,64], index: 5, kind: input, shape index: {}]
  %s6 = inlined_call_operand.hbm [shape: f32[16,64], index: 6, kind: input, shape index: {}]
  %s7 = inlined_call_operand.hbm [shape: bf16[2,2,16,64], index: 7, kind: output, shape index: {0}]
  %s8 = inlined_call_operand.hbm [shape: bf16[2,2,16,64], index: 8, kind: output, shape index: {1}]
  %s9 = inlined_call_operand.hbm [shape: bf16[2,2,16,64], index: 9, kind: output, shape index: {2}]
  %10 = xla_tuple %s7, %s8, %s9
  %s11 = sld [smem:[#allocation0]]
  $region105: #{tpu_custom_call.1} parent=0
    _
  %s13 = ssub.s32 1, %s11
  %s14 = scalar_select 0, %s13, %s11
  $region1: #{tpu_custom_call.1} parent=0
    #allocation2 [shape = 'u8[512]{0}', space=smem, size = 0x200, scoped, tag = 'input window, operand 0, single buffered']
    #allocation3 [shape = 's32[2]{0}', space=sflag, size = 0x8, scoped, tag = 'scoped memory for tpu_custom_call.1']
    #allocation4 [shape = 's32[2]{0}', space=sflag, size = 0x8, scoped, tag = 'scoped memory for tpu_custom_call.1']
    #allocation5 [shape = 's32[2]{0}', space=sflag, size = 0x8, scoped, tag = 'scoped memory for tpu_custom_call.1']
    #allocation6 [shape = 'u8[16384]{0}', space=vmem, size = 0x4000, scoped, tag = 'input window, operand 1']
    #allocation7 [shape = 'u8[16384]{0}', space=vmem, size = 0x4000, scoped, tag = 'input window, operand 2']
    #allocation8 [shape = 's32[2]{0}', space=sflag, size = 0x8, scoped, tag = 'scoped memory for tpu_custom_call.1']
    #allocation9 [shape = 'u8[16384]{0}', space=vmem, size = 0x4000, scoped, tag = 'input window, operand 3']
    #allocation10 [shape = 'u8[98304]{0}', space=vmem, size = 0x18000, scoped, tag = 'input window, operand 4, single buffered']
    #allocation11 [shape = 's32[1]{0}', space=sflag, size = 0x4, scoped, tag = 'scoped memory for tpu_custom_call.1']
    #allocation12 [shape = 'u8[8192]{0}', space=vmem, size = 0x2000, scoped, tag = 'input window, operand 5, single buffered']
    #allocation13 [shape = 'u8[8192]{0}', space=vmem, size = 0x2000, scoped, tag = 'input window, operand 6, single buffered']
    #allocation14 [shape = 's32[1]{0}', space=sflag, size = 0x4, scoped, tag = 'scoped memory for tpu_custom_call.1']
    #allocation15 [shape = 'u8[16384]{0}', space=vmem, size = 0x4000, scoped, tag = 'output window, operand 0']
    #allocation16 [shape = 'u8[16384]{0}', space=vmem, size = 0x4000, scoped, tag = 'output window, operand 1']
    #allocation17 [shape = 's32[2]{0}', space=sflag, size = 0x8, scoped, tag = 'scoped memory for tpu_custom_call.1']
    #allocation18 [shape = 'u8[16384]{0}', space=vmem, size = 0x4000, scoped, tag = 'output window, operand 2']
    %15 = vsyncpa [#allocation5], 0
    %16 = vsyncpa [#allocation3], 0
    %s17 = scalar_lea.sflag [#allocation3], 1
    %18 = vsyncpa %s17, 0
    %19 = vsyncpa [#allocation8], 0
    %s20 = scalar_lea.sflag [#allocation8], 1
    %21 = vsyncpa %s20, 0
    %22 = vsyncpa [#allocation11], 0
    %23 = vsyncpa [#allocation14], 0
    %24 = vsyncpa [#allocation4], 0
    %s25 = scalar_lea.sflag [#allocation4], 1
    %26 = vsyncpa %s25, 0
    %27 = vsyncpa [#allocation17], 0
    %s28 = scalar_lea.sflag [#allocation17], 1
    %29 = vsyncpa %s28, 0
    loop: start=0, step=1, limit=4
    $region2: #{tpu_custom_call.1} parent=1 // loop_pre_header
      _
    $region3: #{tpu_custom_call.1} parent=1 // loop_header
      %s31 = sphi 0, %s35
      %p32 = scmp.ge.s32.totalorder %s31, 4
      %s38 = sphi 0, %s50
      %s39 = sphi 0, %s46
      %s40 = sphi 0, %s38
      %s41 = sphi 0, %s39
      %s42 = sphi 0, %s40
      %s43 = sphi 0, %s41
      %s51 = sphi 0, %s51
      %s53 = sphi 0, %s51
      %s54 = sphi 0, %s53
      %s68 = sphi 0, %s54
      %s76 = sphi 0, %s78
      %s79 = sphi 0, %s76
      %s80 = sphi 0, %s79
      %s96 = sphi 0, %s80
      %s104 = sphi 0, %s106
      %s107 = sphi 0, %s104
      %s108 = sphi 0, %s107
      %s124 = sphi 0, %s108
      %s132 = sphi 0, %s134
      %s135 = sphi 0, %s132
      %s136 = sphi 0, %s135
      %s152 = sphi 0, %s136
      %s156 = sphi 0, %s156
      %s158 = sphi 0, %s156
      %s159 = sphi 0, %s158
      %s173 = sphi 0, %s159
      %s179 = sphi 0, %s181
      %s182 = sphi 0, %s179
      %s183 = sphi 0, %s182
      %s199 = sphi 0, %s183
      %s205 = sphi 0, %s207
      %s208 = sphi 0, %s205
      %s209 = sphi 0, %s208
      %s225 = sphi 0, %s209
      %s233 = sphi 0, %s235
      %s236 = sphi 0, %s233
      %s237 = sphi 0, %s236
      %s253 = sphi 0, %s237
      %s261 = sphi 0, %s263
      %s264 = sphi 0, %s261
      %s265 = sphi 0, %s264
      %s281 = sphi 0, %s265
      %s289 = sphi 0, %s291
      %s292 = sphi 0, %s289
      %s293 = sphi 0, %s292
      %s309 = sphi 0, %s293
    $region4: #{tpu_custom_call.1} parent=1 // loop_header_branch
      %34 = sbr.rel (%p32) target = $region8
    $region5: #{tpu_custom_call.1} parent=1 // loop_body
      %s36 = ssub.s32 %s31, 1
      %s37 = ssub.s32 %s31, 2
      %s44 = sadd.s32 1, %s39
      %p45 = scmp.ge.s32.totalorder %s44, 1
      %s46 = scalar_select %p45, 0, %s44
      %s47 = sadd.s32 1, %s38
      %s48 = scalar_select %p45, %s47, %s38
      %p49 = scmp.ge.s32.totalorder %s48, 2
      %s50 = scalar_select %p49, 0, %s48
      %s52 = sadd.s32 %s51, 1
      %p55 = scmp.eq.s32.totalorder %s31, 1
      %p56 = scmp.ne.s32.totalorder %s51, %s53
      %p57 = scmp.eq.s32.totalorder %s31, 0
      %p58 = por %p56, %p57
      %p59 = scmp.ne.s32.totalorder %s51, %s53
      %p60 = scmp.eq.s32.totalorder %s36, 1
      %p61 = por %p59, %p60
      %p62 = scmp.ne.s32.totalorder %s53, %s54
      %p63 = scmp.eq.s32.totalorder %s36, 0
      %p64 = por %p62, %p63
      %p65 = scmp.ne.s32.totalorder %s53, %s54
      %p66 = scmp.eq.s32.totalorder %s37, 1
      %p67 = por %p65, %p66
      %p69 = scmp.ne.s32.totalorder %s54, %s68
      %p70 = scmp.eq.s32.totalorder %s37, 0
      %p71 = por %p69, %p70
      %s72 = ssub.s32 %s38, %s50
      %s73 = ssub.s32 %s39, %s46
      %s74 = sor.u32 %s72, %s73
      %p75 = scmp.eq.s32.totalorder %s74, 0
      %s77 = sadd.s32 %s76, 1
      %s78 = scalar_select %p75, %s76, %s77
      %p81 = pneg %p75
      %p82 = scmp.eq.s32.totalorder %s31, 1
      %p83 = por %p81, %p82
      %p84 = scmp.ne.s32.totalorder %s76, %s79
      %p85 = scmp.eq.s32.totalorder %s31, 0
      %p86 = por %p84, %p85
      %p87 = scmp.ne.s32.totalorder %s76, %s79
      %p88 = scmp.eq.s32.totalorder %s36, 1
      %p89 = por %p87, %p88
      %p90 = scmp.ne.s32.totalorder %s79, %s80
      %p91 = scmp.eq.s32.totalorder %s36, 0
      %p92 = por %p90, %p91
      %p93 = scmp.ne.s32.totalorder %s79, %s80
      %p94 = scmp.eq.s32.totalorder %s37, 1
      %p95 = por %p93, %p94
      %p97 = scmp.ne.s32.totalorder %s80, %s96
      %p98 = scmp.eq.s32.totalorder %s37, 0
      %p99 = por %p97, %p98
      %s100 = ssub.s32 %s38, %s50
      %s101 = ssub.s32 %s39, %s46
      %s102 = sor.u32 %s100, %s101
      %p103 = scmp.eq.s32.totalorder %s102, 0
      %s105 = sadd.s32 %s104, 1
      %s106 = scalar_select %p103, %s104, %s105
      %p109 = pneg %p103
      %p110 = scmp.eq.s32.totalorder %s31, 1
      %p111 = por %p109, %p110
      %p112 = scmp.ne.s32.totalorder %s104, %s107
      %p113 = scmp.eq.s32.totalorder %s31, 0
      %p114 = por %p112, %p113
      %p115 = scmp.ne.s32.totalorder %s104, %s107
      %p116 = scmp.eq.s32.totalorder %s36, 1
      %p117 = por %p115, %p116
      %p118 = scmp.ne.s32.totalorder %s107, %s108
      %p119 = scmp.eq.s32.totalorder %s36, 0
      %p120 = por %p118, %p119
      %p121 = scmp.ne.s32.totalorder %s107, %s108
      %p122 = scmp.eq.s32.totalorder %s37, 1
      %p123 = por %p121, %p122
      %p125 = scmp.ne.s32.totalorder %s108, %s124
      %p126 = scmp.eq.s32.totalorder %s37, 0
      %p127 = por %p125, %p126
      %s128 = ssub.s32 %s38, %s50
      %s129 = ssub.s32 %s39, %s46
      %s130 = sor.u32 %s128, %s129
      %p131 = scmp.eq.s32.totalorder %s130, 0
      %s133 = sadd.s32 %s132, 1
      %s134 = scalar_select %p131, %s132, %s133
      %p137 = pneg %p131
      %p138 = scmp.eq.s32.totalorder %s31, 1
      %p139 = por %p137, %p138
      %p140 = scmp.ne.s32.totalorder %s132, %s135
      %p141 = scmp.eq.s32.totalorder %s31, 0
      %p142 = por %p140, %p141
      %p143 = scmp.ne.s32.totalorder %s132, %s135
      %p144 = scmp.eq.s32.totalorder %s36, 1
      %p145 = por %p143, %p144
      %p146 = scmp.ne.s32.totalorder %s135, %s136
      %p147 = scmp.eq.s32.totalorder %s36, 0
      %p148 = por %p146, %p147
      %p149 = scmp.ne.s32.totalorder %s135, %s136
      %p150 = scmp.eq.s32.totalorder %s37, 1
      %p151 = por %p149, %p150
      %p153 = scmp.ne.s32.totalorder %s136, %s152
      %p154 = scmp.eq.s32.totalorder %s37, 0
      %p155 = por %p153, %p154
      %s157 = sadd.s32 %s156, 1
      %p160 = scmp.eq.s32.totalorder %s31, 1
      %p161 = scmp.ne.s32.totalorder %s156, %s158
      %p162 = scmp.eq.s32.totalorder %s31, 0
      %p163 = por %p161, %p162
      %p164 = scmp.ne.s32.totalorder %s156, %s158
      %p165 = scmp.eq.s32.totalorder %s36, 1
      %p166 = por %p164, %p165
      %p167 = scmp.ne.s32.totalorder %s158, %s159
      %p168 = scmp.eq.s32.totalorder %s36, 0
      %p169 = por %p167, %p168
      %p170 = scmp.ne.s32.totalorder %s158, %s159
      %p171 = scmp.eq.s32.totalorder %s37, 1
      %p172 = por %p170, %p171
      %p174 = scmp.ne.s32.totalorder %s159, %s173
      %p175 = scmp.eq.s32.totalorder %s37, 0
      %p176 = por %p174, %p175
      %s177 = ssub.s32 %s39, %s46
      %p178 = scmp.eq.s32.totalorder %s177, 0
      %s180 = sadd.s32 %s179, 1
      %s181 = scalar_select %p178, %s179, %s180
      %p184 = pneg %p178
      %p185 = scmp.eq.s32.totalorder %s31, 1
      %p186 = por %p184, %p185
      %p187 = scmp.ne.s32.totalorder %s179, %s182
      %p188 = scmp.eq.s32.totalorder %s31, 0
      %p189 = por %p187, %p188
      %p190 = scmp.ne.s32.totalorder %s179, %s182
      %p191 = scmp.eq.s32.totalorder %s36, 1
      %p192 = por %p190, %p191
      %p193 = scmp.ne.s32.totalorder %s182, %s183
      %p194 = scmp.eq.s32.totalorder %s36, 0
      %p195 = por %p193, %p194
      %p196 = scmp.ne.s32.totalorder %s182, %s183
      %p197 = scmp.eq.s32.totalorder %s37, 1
      %p198 = por %p196, %p197
      %p200 = scmp.ne.s32.totalorder %s183, %s199
      %p201 = scmp.eq.s32.totalorder %s37, 0
      %p202 = por %p200, %p201
      %s203 = ssub.s32 %s39, %s46
      %p204 = scmp.eq.s32.totalorder %s203, 0
      %s206 = sadd.s32 %s205, 1
      %s207 = scalar_select %p204, %s205, %s206
      %p210 = pneg %p204
      %p211 = scmp.eq.s32.totalorder %s31, 1
      %p212 = por %p210, %p211
      %p213 = scmp.ne.s32.totalorder %s205, %s208
      %p214 = scmp.eq.s32.totalorder %s31, 0
      %p215 = por %p213, %p214
      %p216 = scmp.ne.s32.totalorder %s205, %s208
      %p217 = scmp.eq.s32.totalorder %s36, 1
      %p218 = por %p216, %p217
      %p219 = scmp.ne.s32.totalorder %s208, %s209
      %p220 = scmp.eq.s32.totalorder %s36, 0
      %p221 = por %p219, %p220
      %p222 = scmp.ne.s32.totalorder %s208, %s209
      %p223 = scmp.eq.s32.totalorder %s37, 1
      %p224 = por %p222, %p223
      %p226 = scmp.ne.s32.totalorder %s209, %s225
      %p227 = scmp.eq.s32.totalorder %s37, 0
      %p228 = por %p226, %p227
      %s229 = ssub.s32 %s38, %s50
      %s230 = ssub.s32 %s39, %s46
      %s231 = sor.u32 %s229, %s230
      %p232 = scmp.eq.s32.totalorder %s231, 0
      %s234 = sadd.s32 %s233, 1
      %s235 = scalar_select %p232, %s233, %s234
      %p238 = pneg %p232
      %p239 = scmp.eq.s32.totalorder %s31, 1
      %p240 = por %p238, %p239
      %p241 = scmp.ne.s32.totalorder %s233, %s236
      %p242 = scmp.eq.s32.totalorder %s31, 0
      %p243 = por %p241, %p242
      %p244 = scmp.ne.s32.totalorder %s233, %s236
      %p245 = scmp.eq.s32.totalorder %s36, 1
      %p246 = por %p244, %p245
      %p247 = scmp.ne.s32.totalorder %s236, %s237
      %p248 = scmp.eq.s32.totalorder %s36, 0
      %p249 = por %p247, %p248
      %p250 = scmp.ne.s32.totalorder %s236, %s237
      %p251 = scmp.eq.s32.totalorder %s37, 1
      %p252 = por %p250, %p251
      %p254 = scmp.ne.s32.totalorder %s237, %s253
      %p255 = scmp.eq.s32.totalorder %s37, 0
      %p256 = por %p254, %p255
      %s257 = ssub.s32 %s38, %s50
      %s258 = ssub.s32 %s39, %s46
      %s259 = sor.u32 %s257, %s258
      %p260 = scmp.eq.s32.totalorder %s259, 0
      %s262 = sadd.s32 %s261, 1
      %s263 = scalar_select %p260, %s261, %s262
      %p266 = pneg %p260
      %p267 = scmp.eq.s32.totalorder %s31, 1
      %p268 = por %p266, %p267
      %p269 = scmp.ne.s32.totalorder %s261, %s264
      %p270 = scmp.eq.s32.totalorder %s31, 0
      %p271 = por %p269, %p270
      %p272 = scmp.ne.s32.totalorder %s261, %s264
      %p273 = scmp.eq.s32.totalorder %s36, 1
      %p274 = por %p272, %p273
      %p275 = scmp.ne.s32.totalorder %s264, %s265
      %p276 = scmp.eq.s32.totalorder %s36, 0
      %p277 = por %p275, %p276
      %p278 = scmp.ne.s32.totalorder %s264, %s265
      %p279 = scmp.eq.s32.totalorder %s37, 1
      %p280 = por %p278, %p279
      %p282 = scmp.ne.s32.totalorder %s265, %s281
      %p283 = scmp.eq.s32.totalorder %s37, 0
      %p284 = por %p282, %p283
      %s285 = ssub.s32 %s38, %s50
      %s286 = ssub.s32 %s39, %s46
      %s287 = sor.u32 %s285, %s286
      %p288 = scmp.eq.s32.totalorder %s287, 0
      %s290 = sadd.s32 %s289, 1
      %s291 = scalar_select %p288, %s289, %s290
      %p294 = pneg %p288
      %p295 = scmp.eq.s32.totalorder %s31, 1
      %p296 = por %p294, %p295
      %p297 = scmp.ne.s32.totalorder %s289, %s292
      %p298 = scmp.eq.s32.totalorder %s31, 0
      %p299 = por %p297, %p298
      %p300 = scmp.ne.s32.totalorder %s289, %s292
      %p301 = scmp.eq.s32.totalorder %s36, 1
      %p302 = por %p300, %p301
      %p303 = scmp.ne.s32.totalorder %s292, %s293
      %p304 = scmp.eq.s32.totalorder %s36, 0
      %p305 = por %p303, %p304
      %p306 = scmp.ne.s32.totalorder %s292, %s293
      %p307 = scmp.eq.s32.totalorder %s37, 1
      %p308 = por %p306, %p307
      %p310 = scmp.ne.s32.totalorder %s293, %s309
      %p311 = scmp.eq.s32.totalorder %s37, 0
      %p312 = por %p310, %p311
      %p313 = scmp.le.s32.totalorder 1, %s31
      %p314 = scmp.lt.s32.totalorder %s31, 3
      %p315 = pnand %p313, %p314
      %p316 = pneg %p315
      // Predicated region
      $region9: #{tpu_custom_call.1} parent=5 // pred_check
        _
      $region10: #{tpu_custom_call.1} parent=5 // pred_check_branch
        %318 = sbr.rel (%p315) target = $region12
      $region11: #{tpu_custom_call.1} parent=5 // pred_region
        %s319 = ssub.s32 %s31, 1
        // Predicated region
        $region13: #{tpu_custom_call.1} parent=11 // pred_check
          %p320 = pneg %p64
        $region14: #{tpu_custom_call.1} parent=11 // pred_check_branch
          %322 = sbr.rel (%p320) target = $region16
        $region15: #{tpu_custom_call.1} parent=11 // pred_region
          %s324 = ssub.s32 16, 16
          %325 = vsyncadd [#allocation5], %s324
          %328 = dma.hbm_to_smem %s0, 16, [#allocation2], [#allocation5]
        $region16: #{tpu_custom_call.1} parent=11 // pred_fallthru
          _
        // Predicated region
        $region17: #{tpu_custom_call.1} parent=11 // pred_check
          %p329 = pneg %p169
        $region18: #{tpu_custom_call.1} parent=11 // pred_check_branch
          %331 = sbr.rel (%p329) target = $region20
        $region19: #{tpu_custom_call.1} parent=11 // pred_region
          %s333 = ssub.s32 3072, 3072
          %334 = vsyncadd [#allocation11], %s333
          %s335 = sshll.u32 [#allocation10], 4
          %s336 = int_to_ptr.vmem [resolvable:$true] %s335
          %341 = dma.hbm_to_vmem [thread:$0]  %s4, 3072, %s336, [#allocation11], 192, 192, 12
        $region20: #{tpu_custom_call.1} parent=11 // pred_fallthru
          _
        // Predicated region
        $region21: #{tpu_custom_call.1} parent=11 // pred_check
          %p342 = pneg %p195
        $region22: #{tpu_custom_call.1} parent=11 // pred_check_branch
          %344 = sbr.rel (%p342) target = $region24
        $region23: #{tpu_custom_call.1} parent=11 // pred_region
          %s345 = smul.u32 2, %s41
          %s347 = ssub.s32 256, 256
          %348 = vsyncadd [#allocation11], %s347
          %s349 = smul.addr %s345, 128
          %s350 = scalar_lea.hbm %s5, %s349
          %s351 = sshll.u32 [#allocation12], 4
          %s352 = int_to_ptr.vmem [resolvable:$true] %s351
          %357 = dma.hbm_to_vmem [thread:$0]  %s350, 256, %s352, [#allocation11], 128, 128, 8
        $region24: #{tpu_custom_call.1} parent=11 // pred_fallthru
          _
        // Predicated region
        $region25: #{tpu_custom_call.1} parent=11 // pred_check
          %p358 = pneg %p221
        $region26: #{tpu_custom_call.1} parent=11 // pred_check_branch
          %360 = sbr.rel (%p358) target = $region28
        $region27: #{tpu_custom_call.1} parent=11 // pred_region
          %s361 = smul.u32 2, %s41
          %s363 = ssub.s32 256, 256
          %364 = vsyncadd [#allocation14], %s363
          %s365 = smul.addr %s361, 128
          %s366 = scalar_lea.hbm %s6, %s365
          %s367 = sshll.u32 [#allocation13], 4
          %s368 = int_to_ptr.vmem [resolvable:$true] %s367
          %373 = dma.hbm_to_vmem [thread:$0]  %s366, 256, %s368, [#allocation14], 128, 128, 8
        $region28: #{tpu_custom_call.1} parent=11 // pred_fallthru
          _
      $region12: #{tpu_custom_call.1} parent=5 // pred_fallthru
        _
      %p374 = scmp.lt.s32.totalorder %s31, 2
      // Predicated region
      $region29: #{tpu_custom_call.1} parent=5 // pred_check
        %p375 = pneg %p374
      $region30: #{tpu_custom_call.1} parent=5 // pred_check_branch
        %377 = sbr.rel (%p375) target = $region32
      $region31: #{tpu_custom_call.1} parent=5 // pred_region
        // Predicated region
        $region33: #{tpu_custom_call.1} parent=31 // pred_check
          %p378 = pneg %p86
        $region34: #{tpu_custom_call.1} parent=31 // pred_check_branch
          %380 = sbr.rel (%p378) target = $region36
        $region35: #{tpu_custom_call.1} parent=31 // pred_region
          %s381 = sand.u32 %s76, 1
          %s382 = scalar_lea.sflag [#allocation3], %s381
          %s383 = sand.u32 %s76, 1
          %s384 = smul.addr %s383, 16
          %s385 = scalar_lea.vmem [#allocation6], %s384
          %s386 = smul.u32 2, %s39
          %s388 = ssub.s32 256, 256
          %389 = vsyncadd %s382, %s388
          %s390 = smul.addr %s38, 2
          %s391 = sadd.s32 %s386, %s390
          %s392 = smul.addr %s391, 128
          %s393 = scalar_lea.hbm %s1, %s392
          %s394 = sshll.u32 %s385, 4
          %s395 = int_to_ptr.vmem [resolvable:$true] %s394
          %400 = dma.hbm_to_vmem [thread:$0]  %s393, 256, %s395, %s382, 128, 128, 8
        $region36: #{tpu_custom_call.1} parent=31 // pred_fallthru
          _
        // Predicated region
        $region37: #{tpu_custom_call.1} parent=31 // pred_check
          %p401 = pneg %p114
        $region38: #{tpu_custom_call.1} parent=31 // pred_check_branch
          %403 = sbr.rel (%p401) target = $region40
        $region39: #{tpu_custom_call.1} parent=31 // pred_region
          %s404 = sand.u32 %s31, 1
          %s405 = scalar_lea.sflag [#allocation8], %s404
          %s406 = sand.u32 %s104, 1
          %s407 = smul.addr %s406, 16
          %s408 = scalar_lea.vmem [#allocation7], %s407
          %s409 = smul.u32 2, %s39
          %s411 = ssub.s32 256, 256
          %412 = vsyncadd %s405, %s411
          %s413 = smul.addr %s38, 2
          %s414 = sadd.s32 %s409, %s413
          %s415 = smul.addr %s414, 128
          %s416 = scalar_lea.hbm %s2, %s415
          %s417 = sshll.u32 %s408, 4
          %s418 = int_to_ptr.vmem [resolvable:$true] %s417
          %423 = dma.hbm_to_vmem [thread:$0]  %s416, 256, %s418, %s405, 128, 128, 8
        $region40: #{tpu_custom_call.1} parent=31 // pred_fallthru
          _
        // Predicated region
        $region41: #{tpu_custom_call.1} parent=31 // pred_check
          %p424 = pneg %p142
        $region42: #{tpu_custom_call.1} parent=31 // pred_check_branch
          %426 = sbr.rel (%p424) target = $region44
        $region43: #{tpu_custom_call.1} parent=31 // pred_region
          %s427 = sand.u32 %s31, 1
          %s428 = scalar_lea.sflag [#allocation8], %s427
          %s429 = sand.u32 %s132, 1
          %s430 = smul.addr %s429, 16
          %s431 = scalar_lea.vmem [#allocation9], %s430
          %s432 = smul.u32 2, %s39
          %s434 = ssub.s32 256, 256
          %435 = vsyncadd %s428, %s434
          %s436 = smul.addr %s38, 2
          %s437 = sadd.s32 %s432, %s436
          %s438 = smul.addr %s437, 128
          %s439 = scalar_lea.hbm %s3, %s438
          %s440 = sshll.u32 %s431, 4
          %s441 = int_to_ptr.vmem [resolvable:$true] %s440
          %446 = dma.hbm_to_vmem [thread:$0]  %s439, 256, %s441, %s428, 128, 128, 8
        $region44: #{tpu_custom_call.1} parent=31 // pred_fallthru
          _
      $region32: #{tpu_custom_call.1} parent=5 // pred_fallthru
        _
      %p447 = scmp.le.s32.totalorder 1, %s31
      %p448 = scmp.lt.s32.totalorder %s31, 3
      %p449 = pnand %p447, %p448
      %p450 = pneg %p449
      // Predicated region
      $region45: #{tpu_custom_call.1} parent=5 // pred_check
        _
      $region46: #{tpu_custom_call.1} parent=5 // pred_check_branch
        %452 = sbr.rel (%p449) target = $region48
      $region47: #{tpu_custom_call.1} parent=5 // pred_region
        %s453 = ssub.s32 %s31, 1
        // Predicated region
        $region49: #{tpu_custom_call.1} parent=47 // pred_check
          %p454 = pneg %p64
        $region50: #{tpu_custom_call.1} parent=47 // pred_check_branch
          %456 = sbr.rel (%p454) target = $region52
        $region51: #{tpu_custom_call.1} parent=47 // pred_region
          %457 = dma.done [#allocation5], 16
        $region52: #{tpu_custom_call.1} parent=47 // pred_fallthru
          _
        %s458 = sand.u32 %s79, 1
        %s459 = scalar_lea.sflag [#allocation3], %s458
        %s460 = sand.u32 %s79, 1
        %s461 = smul.addr %s460, 16
        %s462 = scalar_lea.vmem [#allocation6], %s461
        // Predicated region
        $region53: #{tpu_custom_call.1} parent=47 // pred_check
          %p463 = pneg %p92
        $region54: #{tpu_custom_call.1} parent=47 // pred_check_branch
          %465 = sbr.rel (%p463) target = $region56
        $region55: #{tpu_custom_call.1} parent=47 // pred_region
          %466 = dma.done %s459, 256
        $region56: #{tpu_custom_call.1} parent=47 // pred_fallthru
          _
        %s467 = sand.u32 %s36, 1
        %s468 = scalar_lea.sflag [#allocation8], %s467
        %s469 = sand.u32 %s107, 1
        %s470 = smul.addr %s469, 16
        %s471 = scalar_lea.vmem [#allocation7], %s470
        // Predicated region
        $region57: #{tpu_custom_call.1} parent=47 // pred_check
          %p472 = pneg %p120
        $region58: #{tpu_custom_call.1} parent=47 // pred_check_branch
          %474 = sbr.rel (%p472) target = $region60
        $region59: #{tpu_custom_call.1} parent=47 // pred_region
          %475 = dma.done %s468, 256
        $region60: #{tpu_custom_call.1} parent=47 // pred_fallthru
          _
        %s476 = sand.u32 %s36, 1
        %s477 = scalar_lea.sflag [#allocation8], %s476
        %s478 = sand.u32 %s135, 1
        %s479 = smul.addr %s478, 16
        %s480 = scalar_lea.vmem [#allocation9], %s479
        // Predicated region
        $region61: #{tpu_custom_call.1} parent=47 // pred_check
          %p481 = pneg %p148
        $region62: #{tpu_custom_call.1} parent=47 // pred_check_branch
          %483 = sbr.rel (%p481) target = $region64
        $region63: #{tpu_custom_call.1} parent=47 // pred_region
          %484 = dma.done %s477, 256
        $region64: #{tpu_custom_call.1} parent=47 // pred_fallthru
          _
        // Predicated region
        $region65: #{tpu_custom_call.1} parent=47 // pred_check
          %p485 = pneg %p169
        $region66: #{tpu_custom_call.1} parent=47 // pred_check_branch
          %487 = sbr.rel (%p485) target = $region68
        $region67: #{tpu_custom_call.1} parent=47 // pred_region
          %488 = dma.done [#allocation11], 3072
        $region68: #{tpu_custom_call.1} parent=47 // pred_fallthru
          _
        // Predicated region
        $region69: #{tpu_custom_call.1} parent=47 // pred_check
          %p489 = pneg %p195
        $region70: #{tpu_custom_call.1} parent=47 // pred_check_branch
          %491 = sbr.rel (%p489) target = $region72
        $region71: #{tpu_custom_call.1} parent=47 // pred_region
          %492 = dma.done [#allocation11], 256
        $region72: #{tpu_custom_call.1} parent=47 // pred_fallthru
          _
        // Predicated region
        $region73: #{tpu_custom_call.1} parent=47 // pred_check
          %p493 = pneg %p221
        $region74: #{tpu_custom_call.1} parent=47 // pred_check_branch
          %495 = sbr.rel (%p493) target = $region76
        $region75: #{tpu_custom_call.1} parent=47 // pred_region
          %496 = dma.done [#allocation14], 256
        $region76: #{tpu_custom_call.1} parent=47 // pred_fallthru
          _
        %497 = sfence
        %p498 = pneg %p64
        %p499 = pneg %p61
        %s500 = sand.u32 %s79, 1
        %s501 = scalar_lea.sflag [#allocation3], %s500
        %s502 = sand.u32 %s79, 1
        %s503 = smul.addr %s502, 16
        %s504 = scalar_lea.vmem [#allocation6], %s503
        %p505 = pneg %p92
        %p506 = pneg %p89
        %s507 = sand.u32 %s36, 1
        %s508 = scalar_lea.sflag [#allocation8], %s507
        %s509 = sand.u32 %s107, 1
        %s510 = smul.addr %s509, 16
        %s511 = scalar_lea.vmem [#allocation7], %s510
        %p512 = pneg %p120
        %p513 = pneg %p117
        %s514 = sand.u32 %s36, 1
        %s515 = scalar_lea.sflag [#allocation8], %s514
        %s516 = sand.u32 %s135, 1
        %s517 = smul.addr %s516, 16
        %s518 = scalar_lea.vmem [#allocation9], %s517
        %p519 = pneg %p148
        %p520 = pneg %p145
        %p521 = pneg %p169
        %p522 = pneg %p166
        %p523 = pneg %p195
        %p524 = pneg %p192
        %p525 = pneg %p221
        %p526 = pneg %p218
        %p527 = pneg %p249
        %p528 = pneg %p246
        %s529 = sand.u32 %s236, 1
        %s530 = scalar_lea.sflag [#allocation4], %s529
        %s531 = sand.u32 %s236, 1
        %s532 = smul.addr %s531, 16
        %s533 = scalar_lea.vmem [#allocation15], %s532
        %p534 = pneg %p277
        %p535 = pneg %p274
        %s536 = sand.u32 %s36, 1
        %s537 = scalar_lea.sflag [#allocation17], %s536
        %s538 = sand.u32 %s264, 1
        %s539 = smul.addr %s538, 16
        %s540 = scalar_lea.vmem [#allocation16], %s539
        %p541 = pneg %p305
        %p542 = pneg %p302
        %s543 = sand.u32 %s36, 1
        %s544 = scalar_lea.sflag [#allocation17], %s543
        %s545 = sand.u32 %s292, 1
        %s546 = smul.addr %s545, 16
        %s547 = scalar_lea.vmem [#allocation18], %s546
        %s548 = smul.u32 2, %s41
        %s549 = smul.u32 2, %s41
        %s550 = smul.u32 2, %s41
        %s551 = smul.u32 2, %s41
        %s552 = smul.u32 2, %s41
        %s553 = smul.u32 2, %s41
        %s554 = smul.u32 2, %s41
        %s555 = smul.u32 2, %s41
        %v557 = vld [vmem:[%s480] sm:$0xff]
        %v558 = vld [vmem:[%s480 + $0x8] sm:$0xff]
        %s559 = sld [smem:[#allocation2]]
        %s560 = sld [smem:[#allocation2 + $0x1]]
        %s561 = sld [smem:[#allocation2 + $0x2]]
        %v562 = vld [vmem:[%s462] sm:$0xff]
        %v563 = vld [vmem:[%s462 + $0x8] sm:$0xff]
        %v564 = vstv %s559
        %v565 = vmul.f32 %v564, %v562
        %v566 = vmul.f32 %v564, %v563
        %v567 = vld [vmem:[%s471] sm:$0xff]
        %v568 = vld [vmem:[%s471 + $0x8] sm:$0xff]
        %v569 = vstv %s560
        %v570 = vmul.f32 %v569, %v567
        %v571 = vmul.f32 %v569, %v568
        %v572 = vadd.f32 %v565, %v570
        %v573 = vadd.f32 %v566, %v571
        %v574 = vmul.f32 %v572, %v572
        %v575 = vmul.f32 %v573, %v573
        %576 = vadd.xlane.f32.xlu0 %v574
        %v577 = vpop.xlane.xlu0 %576
        %578 = vadd.xlane.f32.xlu0 %v575
        %v579 = vpop.xlane.xlu0 %578
        %v580 = vrcp.pop 128.0
        %v581 = vmul.f32 %v577, %v580
        %v582 = vmul.f32 %v579, %v580
        %v583 = vadd.f32 %v581, 1.1920929e-07
        %v584 = vadd.f32 %v582, 1.1920929e-07
        %v585 = vrsqrt.pop %v583
        %v586 = vrsqrt.pop %v584
        %v587 = vmul.f32 %v572, %v585
        %v588 = vmul.f32 %v573, %v586
        %v589 = vpack.c.bf16 %v588, %v587
        %v590 = vld [vmem:[#allocation10] sm:$0xff]
        %v591 = vld [vmem:[#allocation10 + $0x8] sm:$0xf]
        %v592 = vld [vmem:[#allocation10 + $0xc] sm:$0xff]
        %v593 = vld [vmem:[#allocation10 + $0x14] sm:$0xf]
        %v594 = vld [vmem:[#allocation10 + $0x18] sm:$0xff]
        %v595 = vld [vmem:[#allocation10 + $0x20] sm:$0xf]
        %v596 = vld [vmem:[#allocation10 + $0x24] sm:$0xff]
        %v597 = vld [vmem:[#allocation10 + $0x2c] sm:$0xf]
        %v598 = vld [vmem:[#allocation10 + $0x30] sm:$0xff]
        %v599 = vld [vmem:[#allocation10 + $0x38] sm:$0xf]
        %v600 = vld [vmem:[#allocation10 + $0x3c] sm:$0xff]
        %v601 = vld [vmem:[#allocation10 + $0x44] sm:$0xf]
        %v602 = vld [vmem:[#allocation10 + $0x48] sm:$0xff]
        %v603 = vld [vmem:[#allocation10 + $0x50] sm:$0xf]
        %v604 = vld [vmem:[#allocation10 + $0x54] sm:$0xff]
        %v605 = vld [vmem:[#allocation10 + $0x5c] sm:$0xf]
        %v606 = vld [vmem:[#allocation10 + $0x60] sm:$0xff]
        %v607 = vld [vmem:[#allocation10 + $0x68] sm:$0xf]
        %v608 = vld [vmem:[#allocation10 + $0x6c] sm:$0xff]
        %v609 = vld [vmem:[#allocation10 + $0x74] sm:$0xf]
        %v610 = vld [vmem:[#allocation10 + $0x78] sm:$0xff]
        %v611 = vld [vmem:[#allocation10 + $0x80] sm:$0xf]
        %v612 = vld [vmem:[#allocation10 + $0x84] sm:$0xff]
        %v613 = vld [vmem:[#allocation10 + $0x8c] sm:$0xf]
        %v614 = vld [vmem:[#allocation10 + $0x90] sm:$0xff]
        %v615 = vld [vmem:[#allocation10 + $0x98] sm:$0xf]
        %v616 = vld [vmem:[#allocation10 + $0x9c] sm:$0xff]
        %v617 = vld [vmem:[#allocation10 + $0xa4] sm:$0xf]
        %v618 = vld [vmem:[#allocation10 + $0xa8] sm:$0xff]
        %v619 = vld [vmem:[#allocation10 + $0xb0] sm:$0xf]
        %v620 = vld [vmem:[#allocation10 + $0xb4] sm:$0xff]
        %v621 = vld [vmem:[#allocation10 + $0xbc] sm:$0xf]
        %v654 = vunpack.c.l.b16 %v590
        %v655 = vunpack.c.h.b16 %v590
        %v656 = vunpack.c.l.b16 %v591
        %v657 = vunpack.c.l.b16 %v592
        %v658 = vunpack.c.h.b16 %v592
        %v659 = vunpack.c.l.b16 %v593
        %v660 = vunpack.c.l.b16 %v594
        %v661 = vunpack.c.h.b16 %v594
        %v662 = vunpack.c.l.b16 %v595
        %v663 = vunpack.c.l.b16 %v596
        %v664 = vunpack.c.h.b16 %v596
        %v665 = vunpack.c.l.b16 %v597
        %v666 = vunpack.c.l.b16 %v598
        %v667 = vunpack.c.h.b16 %v598
        %v668 = vunpack.c.l.b16 %v599
        %v669 = vunpack.c.l.b16 %v600
        %v670 = vunpack.c.h.b16 %v600
        %v671 = vunpack.c.l.b16 %v601
        %v672 = vunpack.c.l.b16 %v602
        %v673 = vunpack.c.h.b16 %v602
        %v674 = vunpack.c.l.b16 %v603
        %v675 = vunpack.c.l.b16 %v604
        %v676 = vunpack.c.h.b16 %v604
        %v677 = vunpack.c.l.b16 %v605
        %v678 = vunpack.c.l.b16 %v606
        %v679 = vunpack.c.h.b16 %v606
        %v680 = vunpack.c.l.b16 %v607
        %v681 = vunpack.c.l.b16 %v608
        %v682 = vunpack.c.h.b16 %v608
        %v683 = vunpack.c.l.b16 %v609
        %v684 = vunpack.c.l.b16 %v610
        %v685 = vunpack.c.h.b16 %v610
        %v686 = vunpack.c.l.b16 %v611
        %v687 = vunpack.c.l.b16 %v612
        %v688 = vunpack.c.h.b16 %v612
        %v689 = vunpack.c.l.b16 %v613
        %v690 = vunpack.c.l.b16 %v614
        %v691 = vunpack.c.h.b16 %v614
        %v692 = vunpack.c.l.b16 %v615
        %v693 = vunpack.c.l.b16 %v616
        %v694 = vunpack.c.h.b16 %v616
        %v695 = vunpack.c.l.b16 %v617
        %v696 = vunpack.c.l.b16 %v618
        %v697 = vunpack.c.h.b16 %v618
        %v698 = vunpack.c.l.b16 %v619
        %v699 = vunpack.c.l.b16 %v620
        %v700 = vunpack.c.h.b16 %v620
        %v701 = vunpack.c.l.b16 %v621
        %v702 = vpack.c.b16 %v657, %v654
        %v703 = vpack.c.b16 %v658, %v655
        %v704 = vpack.c.b16 %v659, %v656
        %v705 = vpack.c.b16 %v663, %v660
        %v706 = vpack.c.b16 %v664, %v661
        %v707 = vpack.c.b16 %v665, %v662
        %v708 = vpack.c.b16 %v669, %v666
        %v709 = vpack.c.b16 %v670, %v667
        %v710 = vpack.c.b16 %v671, %v668
        %v711 = vpack.c.b16 %v675, %v672
        %v712 = vpack.c.b16 %v676, %v673
        %v713 = vpack.c.b16 %v677, %v674
        %v714 = vpack.c.b16 %v681, %v678
        %v715 = vpack.c.b16 %v682, %v679
        %v716 = vpack.c.b16 %v683, %v680
        %v717 = vpack.c.b16 %v687, %v684
        %v718 = vpack.c.b16 %v688, %v685
        %v719 = vpack.c.b16 %v689, %v686
        %v720 = vpack.c.b16 %v693, %v690
        %v721 = vpack.c.b16 %v694, %v691
        %v722 = vpack.c.b16 %v695, %v692
        %v723 = vpack.c.b16 %v699, %v696
        %v724 = vpack.c.b16 %v700, %v697
        %v725 = vpack.c.b16 %v701, %v698
        %750 = vmatprep.subr.bf16.mxu0 %v703
        %751 = vmatpush1.bf16.msra.mxu0 %v702
        %752 = vmatprep.subr.bf16.mxu0 %v706
        %753 = vmatpush1.bf16.msra.mxu0 %v705
        %754 = vmatprep.subr.bf16.mxu0 %v709
        %755 = vmatpush1.bf16.msra.mxu0 %v708
        %756 = vmatprep.subr.bf16.mxu0 %v712
        %757 = vmatpush1.bf16.msra.mxu0 %v711
        %758 = vmatprep.subr.bf16.mxu0 %v715
        %759 = vmatpush1.bf16.msra.mxu0 %v714
        %760 = vmatprep.subr.bf16.mxu0 %v718
        %761 = vmatpush1.bf16.msra.mxu0 %v717
        %762 = vmatprep.subr.bf16.mxu0 %v721
        %763 = vmatpush1.bf16.msra.mxu0 %v720
        %764 = vmatprep.subr.bf16.mxu0 %v724
        %765 = vmatpush1.bf16.msra.mxu0 %v723
        %766 = vmatprep.subr.bf16.mxu0 0
        %767 = vmatpush1.bf16.msra.mxu0 0
        %768 = vmatprep.subr.bf16.mxu0 0
        %769 = vmatpush1.bf16.msra.mxu0 0
        %770 = vmatprep.subr.bf16.mxu0 0
        %771 = vmatpush1.bf16.msra.mxu0 0
        %772 = vmatprep.subr.bf16.mxu0 0
        %773 = vmatpush1.bf16.msra.mxu0 0
        %774 = vmatprep.subr.bf16.mxu0 0
        %775 = vmatpush1.bf16.msra.mxu0 0
        %776 = vmatprep.subr.bf16.mxu0 0
        %777 = vmatpush1.bf16.msra.mxu0 0
        %778 = vmatprep.subr.bf16.mxu0 0
        %779 = vmatpush1.bf16.msra.mxu0 0
        %780 = vmatprep.subr.bf16.mxu0 0
        %781 = vmatpush1.bf16.msra.mxu0 0
        %782 = vmatprep.mubr.bf16.mxu0 0
        %783 = vmatmul.mubr.bf16.gmra.mrb[0].mxu0 %v589
        %v784 = vpop.f32.mrb[0].mxu0
        %v785 = vadd.f32 0.0, %v784
        %v786 = vpop.f32.mrb[0].mxu0
        %v787 = vadd.f32 0.0, %v786
        %v788 = vpop.f32.mrb[0].mxu0
        %v789 = vadd.f32 0.0, %v788
        %v790 = vpop.f32.mrb[0].mxu0
        %v791 = vadd.f32 0.0, %v790
        %792 = vdwg.mxu0
        %793 = vmatprep.subr.bf16.mxu0 0
        %794 = vmatpush1.bf16.msra.mxu0 %v704
        %795 = vmatprep.subr.bf16.mxu0 0
        %796 = vmatpush1.bf16.msra.mxu0 %v707
        %797 = vmatprep.subr.bf16.mxu0 0
        %798 = vmatpush1.bf16.msra.mxu0 %v710
        %799 = vmatprep.subr.bf16.mxu0 0
        %800 = vmatpush1.bf16.msra.mxu0 %v713
        %801 = vmatprep.subr.bf16.mxu0 0
        %802 = vmatpush1.bf16.msra.mxu0 %v716
        %803 = vmatprep.subr.bf16.mxu0 0
        %804 = vmatpush1.bf16.msra.mxu0 %v719
        %805 = vmatprep.subr.bf16.mxu0 0
        %806 = vmatpush1.bf16.msra.mxu0 %v722
        %807 = vmatprep.subr.bf16.mxu0 0
        %808 = vmatpush1.bf16.msra.mxu0 %v725
        %809 = vmatprep.subr.bf16.mxu0 0
        %810 = vmatpush1.bf16.msra.mxu0 0
        %811 = vmatprep.subr.bf16.mxu0 0
        %812 = vmatpush1.bf16.msra.mxu0 0
        %813 = vmatprep.subr.bf16.mxu0 0
        %814 = vmatpush1.bf16.msra.mxu0 0
        %815 = vmatprep.subr.bf16.mxu0 0
        %816 = vmatpush1.bf16.msra.mxu0 0
        %817 = vmatprep.subr.bf16.mxu0 0
        %818 = vmatpush1.bf16.msra.mxu0 0
        %819 = vmatprep.subr.bf16.mxu0 0
        %820 = vmatpush1.bf16.msra.mxu0 0
        %821 = vmatprep.subr.bf16.mxu0 0
        %822 = vmatpush1.bf16.msra.mxu0 0
        %823 = vmatprep.subr.bf16.mxu0 0
        %824 = vmatpush1.bf16.msra.mxu0 0
        %825 = vmatprep.mubr.bf16.mxu0 0
        %826 = vmatmul.mubr.bf16.gmra.mrb[0].mxu0 %v589
        %v827 = vpop.f32.mrb[0].mxu0
        %v828 = vadd.f32 0.0, %v827
        %v829 = vpop.f32.mrb[0].mxu0
        %v830 = vpop.f32.mrb[0].mxu0
        %v831 = vadd.f32 0.0, %v830
        %v832 = vpop.f32.mrb[0].mxu0
        %833 = vdwg.mxu0
        %s834 = ssub.f32 1.0, %s561
        %v835 = vstv %s834
        %v836 = vmul.f32 %v835, %v828
        %v837 = vmul.f32 %v835, %v831
        %v838 = vstv %s561
        %v839 = vmul.f32 %v838, %v557
        %v840 = vmul.f32 %v838, %v558
        %v841 = vadd.f32 %v836, %v839
        %v842 = vadd.f32 %v837, %v840
        %845 = vrot.lane.b32.xlu0 %v785, 64
        %v846 = vpop.permute.xlu0 %845
        %847 = vrot.lane.b32.xlu0 %v789, 64
        %v848 = vpop.permute.xlu0 %847
        %v851 = vmul.f32 %v785, %v785
        %v852 = vmul.f32 %v789, %v789
        %v853 = vmul.f32 %v846, %v846
        %v854 = vmul.f32 %v848, %v848
        %vm855 = vcmask 523264
        %v856 = vsel %vm855, %v851, 0.0
        %857 = vadd.xlane.f32.xlu0 %v856
        %v858 = vpop.xlane.xlu0 %857
        %v859 = vsel %vm855, %v852, 0.0
        %860 = vadd.xlane.f32.xlu0 %v859
        %v861 = vpop.xlane.xlu0 %860
        %v862 = vsel %vm855, %v853, 0.0
        %863 = vadd.xlane.f32.xlu0 %v862
        %v864 = vpop.xlane.xlu0 %863
        %v865 = vsel %vm855, %v854, 0.0
        %866 = vadd.xlane.f32.xlu0 %v865
        %v867 = vpop.xlane.xlu0 %866
        %v868 = vrcp.pop 64.0
        %v869 = vmul.f32 %v858, %v868
        %v870 = vmul.f32 %v861, %v868
        %v871 = vmul.f32 %v864, %v868
        %v872 = vmul.f32 %v867, %v868
        %v873 = vadd.f32 %v869, 1.1920929e-07
        %v874 = vadd.f32 %v870, 1.1920929e-07
        %v875 = vadd.f32 %v871, 1.1920929e-07
        %v876 = vadd.f32 %v872, 1.1920929e-07
        %v877 = vrsqrt.pop %v873
        %v878 = vrsqrt.pop %v874
        %v879 = vrsqrt.pop %v875
        %v880 = vrsqrt.pop %v876
        %v881 = vmul.f32 %v785, %v877
        %v882 = vmul.f32 %v789, %v878
        %v883 = vmul.f32 %v846, %v879
        %v884 = vmul.f32 %v848, %v880
        %887 = vrot.lane.b32.xlu0 %v787, 64
        %v888 = vpop.permute.xlu0 %887
        %889 = vrot.lane.b32.xlu0 %v791, 64
        %v890 = vpop.permute.xlu0 %889
        %v893 = vmul.f32 %v787, %v787
        %v894 = vmul.f32 %v791, %v791
        %v895 = vmul.f32 %v888, %v888
        %v896 = vmul.f32 %v890, %v890
        %v897 = vsel %vm855, %v893, 0.0
        %898 = vadd.xlane.f32.xlu0 %v897
        %v899 = vpop.xlane.xlu0 %898
        %v900 = vsel %vm855, %v894, 0.0
        %901 = vadd.xlane.f32.xlu0 %v900
        %v902 = vpop.xlane.xlu0 %901
        %v903 = vsel %vm855, %v895, 0.0
        %904 = vadd.xlane.f32.xlu0 %v903
        %v905 = vpop.xlane.xlu0 %904
        %v906 = vsel %vm855, %v896, 0.0
        %907 = vadd.xlane.f32.xlu0 %v906
        %v908 = vpop.xlane.xlu0 %907
        %v909 = vmul.f32 %v899, %v868
        %v910 = vmul.f32 %v902, %v868
        %v911 = vmul.f32 %v905, %v868
        %v912 = vmul.f32 %v908, %v868
        %v913 = vadd.f32 %v909, 1.1920929e-07
        %v914 = vadd.f32 %v910, 1.1920929e-07
        %v915 = vadd.f32 %v911, 1.1920929e-07
        %v916 = vadd.f32 %v912, 1.1920929e-07
        %v917 = vrsqrt.pop %v913
        %v918 = vrsqrt.pop %v914
        %v919 = vrsqrt.pop %v915
        %v920 = vrsqrt.pop %v916
        %v921 = vmul.f32 %v787, %v917
        %v922 = vmul.f32 %v791, %v918
        %v923 = vmul.f32 %v888, %v919
        %v924 = vmul.f32 %v890, %v920
        %v925 = vld [vmem:[#allocation12] sm:$0xff]
        %v926 = vld [vmem:[#allocation12 + $0x8] sm:$0xff]
        %v927 = vld [vmem:[#allocation13] sm:$0xff]
        %v928 = vld [vmem:[#allocation13 + $0x8] sm:$0xff]
        %933 = vrot.lane.b32.xlu0 %v881, 96
        %v934 = vpop.permute.xlu0 %933
        %935 = vrot.lane.b32.xlu0 %v882, 96
        %v936 = vpop.permute.xlu0 %935
        %937 = vrot.lane.b32.xlu0 %v883, 96
        %v938 = vpop.permute.xlu0 %937
        %939 = vrot.lane.b32.xlu0 %v884, 96
        %v940 = vpop.permute.xlu0 %939
        %945 = vrot.lane.b32.xlu0 %v881, 32
        %v946 = vpop.permute.xlu0 %945
        %947 = vrot.lane.b32.xlu0 %v882, 32
        %v948 = vpop.permute.xlu0 %947
        %949 = vrot.lane.b32.xlu0 %v883, 32
        %v950 = vpop.permute.xlu0 %949
        %951 = vrot.lane.b32.xlu0 %v884, 32
        %v952 = vpop.permute.xlu0 %951
        %vm957 = vcmask 261120
        %v958 = vsel %vm957, %v934, %v946
        %v959 = vsel %vm957, %v936, %v948
        %v960 = vsel %vm957, %v938, %v950
        %v961 = vsel %vm957, %v940, %v952
        %v962 = vmul.f32 %v881, %v925
        %v963 = vmul.f32 %v882, %v926
        %v964 = vmul.f32 %v883, %v925
        %v965 = vmul.f32 %v884, %v926
        %v966 = vmul.f32 %v958, %v927
        %v967 = vmul.f32 %v959, %v928
        %v968 = vmul.f32 %v960, %v927
        %v969 = vmul.f32 %v961, %v928
        %v970 = vadd.f32 %v962, %v966
        %v971 = vadd.f32 %v963, %v967
        %v972 = vadd.f32 %v964, %v968
        %v973 = vadd.f32 %v965, %v969
        %v974 = vpack.c.bf16 %v971, %v970
        %v975 = vpack.c.bf16 %v973, %v972
        %v978 = vunpack.c.l.b16 %v974
        %v979 = vunpack.c.h.b16 %v974
        %v980 = vunpack.c.l.b16 %v975
        %v981 = vunpack.c.h.b16 %v975
        %v982 = vpack.c.b16 %v978, %v978
        %v983 = vpack.c.b16 %v979, %v979
        %v984 = vpack.c.b16 %v980, %v980
        %v985 = vpack.c.b16 %v981, %v981
        %vm990 = vcmask 519168
        %991 = vst.msk [vmem:[%s533] sm:$0xf] %vm990, %v982
        %992 = vst.msk [vmem:[%s533 + $0x4] sm:$0xf] %vm990, %v983
        %993 = vst.msk [vmem:[%s533 + $0x8] sm:$0xf] %vm990, %v984
        %994 = vst.msk [vmem:[%s533 + $0xc] sm:$0xf] %vm990, %v985
        %999 = vrot.lane.b32.xlu0 %v921, 96
        %v1000 = vpop.permute.xlu0 %999
        %1001 = vrot.lane.b32.xlu0 %v922, 96
        %v1002 = vpop.permute.xlu0 %1001
        %1003 = vrot.lane.b32.xlu0 %v923, 96
        %v1004 = vpop.permute.xlu0 %1003
        %1005 = vrot.lane.b32.xlu0 %v924, 96
        %v1006 = vpop.permute.xlu0 %1005
        %1011 = vrot.lane.b32.xlu0 %v921, 32
        %v1012 = vpop.permute.xlu0 %1011
        %1013 = vrot.lane.b32.xlu0 %v922, 32
        %v1014 = vpop.permute.xlu0 %1013
        %1015 = vrot.lane.b32.xlu0 %v923, 32
        %v1016 = vpop.permute.xlu0 %1015
        %1017 = vrot.lane.b32.xlu0 %v924, 32
        %v1018 = vpop.permute.xlu0 %1017
        %v1023 = vsel %vm957, %v1000, %v1012
        %v1024 = vsel %vm957, %v1002, %v1014
        %v1025 = vsel %vm957, %v1004, %v1016
        %v1026 = vsel %vm957, %v1006, %v1018
        %v1027 = vmul.f32 %v921, %v925
        %v1028 = vmul.f32 %v922, %v926
        %v1029 = vmul.f32 %v923, %v925
        %v1030 = vmul.f32 %v924, %v926
        %v1031 = vmul.f32 %v1023, %v927
        %v1032 = vmul.f32 %v1024, %v928
        %v1033 = vmul.f32 %v1025, %v927
        %v1034 = vmul.f32 %v1026, %v928
        %v1035 = vadd.f32 %v1027, %v1031
        %v1036 = vadd.f32 %v1028, %v1032
        %v1037 = vadd.f32 %v1029, %v1033
        %v1038 = vadd.f32 %v1030, %v1034
        %v1039 = vpack.c.bf16 %v1036, %v1035
        %v1040 = vpack.c.bf16 %v1038, %v1037
        %v1043 = vunpack.c.l.b16 %v1039
        %v1044 = vunpack.c.h.b16 %v1039
        %v1045 = vunpack.c.l.b16 %v1040
        %v1046 = vunpack.c.h.b16 %v1040
        %v1047 = vpack.c.b16 %v1043, %v1043
        %v1048 = vpack.c.b16 %v1044, %v1044
        %v1049 = vpack.c.b16 %v1045, %v1045
        %v1050 = vpack.c.b16 %v1046, %v1046
        %1055 = vst.msk [vmem:[%s540] sm:$0xf] %vm990, %v1047
        %1056 = vst.msk [vmem:[%s540 + $0x4] sm:$0xf] %vm990, %v1048
        %1057 = vst.msk [vmem:[%s540 + $0x8] sm:$0xf] %vm990, %v1049
        %1058 = vst.msk [vmem:[%s540 + $0xc] sm:$0xf] %vm990, %v1050
        %1061 = vrot.lane.b32.xlu0 %v841, 64
        %v1062 = vpop.permute.xlu0 %1061
        %1063 = vrot.lane.b32.xlu0 %v842, 64
        %v1064 = vpop.permute.xlu0 %1063
        %v1067 = vpack.c.bf16 %v842, %v841
        %v1068 = vpack.c.bf16 %v1064, %v1062
        %v1071 = vunpack.c.l.b16 %v1067
        %v1072 = vunpack.c.h.b16 %v1067
        %v1073 = vunpack.c.l.b16 %v1068
        %v1074 = vunpack.c.h.b16 %v1068
        %v1075 = vpack.c.b16 %v1071, %v1071
        %v1076 = vpack.c.b16 %v1072, %v1072
        %v1077 = vpack.c.b16 %v1073, %v1073
        %v1078 = vpack.c.b16 %v1074, %v1074
        %1083 = vst.msk [vmem:[%s547] sm:$0xf] %vm990, %v1075
        %1084 = vst.msk [vmem:[%s547 + $0x4] sm:$0xf] %vm990, %v1076
        %1085 = vst.msk [vmem:[%s547 + $0x8] sm:$0xf] %vm990, %v1077
        %1086 = vst.msk [vmem:[%s547 + $0xc] sm:$0xf] %vm990, %v1078
        %s1087 = sand.u32 %s236, 1
        %s1088 = scalar_lea.sflag [#allocation4], %s1087
        %s1089 = sand.u32 %s236, 1
        %s1090 = smul.addr %s1089, 16
        %s1091 = scalar_lea.vmem [#allocation15], %s1090
        %s1092 = sand.u32 %s36, 1
        %s1093 = scalar_lea.sflag [#allocation17], %s1092
        %s1094 = sand.u32 %s264, 1
        %s1095 = smul.addr %s1094, 16
        %s1096 = scalar_lea.vmem [#allocation16], %s1095
        %s1097 = sand.u32 %s36, 1
        %s1098 = scalar_lea.sflag [#allocation17], %s1097
        %s1099 = sand.u32 %s292, 1
        %s1100 = smul.addr %s1099, 16
        %s1101 = scalar_lea.vmem [#allocation18], %s1100
        // Predicated region
        $region77: #{tpu_custom_call.1} parent=47 // pred_check
          %p1102 = pneg %p246
        $region78: #{tpu_custom_call.1} parent=47 // pred_check_branch
          %1104 = sbr.rel (%p1102) target = $region80
        $region79: #{tpu_custom_call.1} parent=47 // pred_region
          %s1105 = smul.u32 2, %s41
          %s1107 = ssub.s32 256, 256
          %1108 = vsyncadd %s1088, %s1107
          %s1109 = smul.addr %s40, 4
          %s1110 = sadd.s32 %s1105, %s1109
          %s1111 = smul.addr %s1110, 64
          %s1112 = scalar_lea.hbm %s7, %s1111
          %s1113 = sshll.u32 %s1091, 4
          %s1114 = int_to_ptr.vmem [resolvable:$true] %s1113
          %1119 = dma.vmem_to_hbm [thread:$0]  %s1114, 256, %s1112, %s1088, 64, 64, 4
        $region80: #{tpu_custom_call.1} parent=47 // pred_fallthru
          _
        // Predicated region
        $region81: #{tpu_custom_call.1} parent=47 // pred_check
          %p1120 = pneg %p274
        $region82: #{tpu_custom_call.1} parent=47 // pred_check_branch
          %1122 = sbr.rel (%p1120) target = $region84
        $region83: #{tpu_custom_call.1} parent=47 // pred_region
          %s1123 = smul.u32 2, %s41
          %s1125 = ssub.s32 256, 256
          %1126 = vsyncadd %s1093, %s1125
          %s1127 = smul.addr %s40, 4
          %s1128 = sadd.s32 %s1123, %s1127
          %s1129 = smul.addr %s1128, 64
          %s1130 = scalar_lea.hbm %s8, %s1129
          %s1131 = sshll.u32 %s1096, 4
          %s1132 = int_to_ptr.vmem [resolvable:$true] %s1131
          %1137 = dma.vmem_to_hbm [thread:$0]  %s1132, 256, %s1130, %s1093, 64, 64, 4
        $region84: #{tpu_custom_call.1} parent=47 // pred_fallthru
          _
        // Predicated region
        $region85: #{tpu_custom_call.1} parent=47 // pred_check
          %p1138 = pneg %p302
        $region86: #{tpu_custom_call.1} parent=47 // pred_check_branch
          %1140 = sbr.rel (%p1138) target = $region88
        $region87: #{tpu_custom_call.1} parent=47 // pred_region
          %s1141 = smul.u32 2, %s41
          %s1143 = ssub.s32 256, 256
          %1144 = vsyncadd %s1098, %s1143
          %s1145 = smul.addr %s40, 4
          %s1146 = sadd.s32 %s1141, %s1145
          %s1147 = smul.addr %s1146, 64
          %s1148 = scalar_lea.hbm %s9, %s1147
          %s1149 = sshll.u32 %s1101, 4
          %s1150 = int_to_ptr.vmem [resolvable:$true] %s1149
          %1155 = dma.vmem_to_hbm [thread:$0]  %s1150, 256, %s1148, %s1098, 64, 64, 4
        $region88: #{tpu_custom_call.1} parent=47 // pred_fallthru
          _
      $region48: #{tpu_custom_call.1} parent=5 // pred_fallthru
        _
      %p1156 = scmp.le.s32.totalorder 2, %s31
      // Predicated region
      $region89: #{tpu_custom_call.1} parent=5 // pred_check
        %p1157 = pneg %p1156
      $region90: #{tpu_custom_call.1} parent=5 // pred_check_branch
        %1159 = sbr.rel (%p1157) target = $region92
      $region91: #{tpu_custom_call.1} parent=5 // pred_region
        %s1160 = ssub.s32 %s31, 2
        // Predicated region
        $region93: #{tpu_custom_call.1} parent=91 // pred_check
          %p1161 = pneg %p252
        $region94: #{tpu_custom_call.1} parent=91 // pred_check_branch
          %1163 = sbr.rel (%p1161) target = $region96
        $region95: #{tpu_custom_call.1} parent=91 // pred_region
          %s1164 = sand.u32 %s237, 1
          %s1165 = scalar_lea.sflag [#allocation4], %s1164
          %s1166 = sand.u32 %s237, 1
          %s1167 = smul.addr %s1166, 16
          %s1168 = scalar_lea.vmem [#allocation15], %s1167
          %1169 = dma.done %s1165, 256
        $region96: #{tpu_custom_call.1} parent=91 // pred_fallthru
          _
        // Predicated region
        $region97: #{tpu_custom_call.1} parent=91 // pred_check
          %p1170 = pneg %p280
        $region98: #{tpu_custom_call.1} parent=91 // pred_check_branch
          %1172 = sbr.rel (%p1170) target = $region100
        $region99: #{tpu_custom_call.1} parent=91 // pred_region
          %s1173 = sand.u32 %s37, 1
          %s1174 = scalar_lea.sflag [#allocation17], %s1173
          %s1175 = sand.u32 %s265, 1
          %s1176 = smul.addr %s1175, 16
          %s1177 = scalar_lea.vmem [#allocation16], %s1176
          %1178 = dma.done %s1174, 256
        $region100: #{tpu_custom_call.1} parent=91 // pred_fallthru
          _
        // Predicated region
        $region101: #{tpu_custom_call.1} parent=91 // pred_check
          %p1179 = pneg %p308
        $region102: #{tpu_custom_call.1} parent=91 // pred_check_branch
          %1181 = sbr.rel (%p1179) target = $region104
        $region103: #{tpu_custom_call.1} parent=91 // pred_region
          %s1182 = sand.u32 %s37, 1
          %s1183 = scalar_lea.sflag [#allocation17], %s1182
          %s1184 = sand.u32 %s293, 1
          %s1185 = smul.addr %s1184, 16
          %s1186 = scalar_lea.vmem [#allocation18], %s1185
          %1187 = dma.done %s1183, 256
        $region104: #{tpu_custom_call.1} parent=91 // pred_fallthru
          _
      $region92: #{tpu_custom_call.1} parent=5 // pred_fallthru
        _
    $region6: #{tpu_custom_call.1} parent=1 // loop_footer
      %s35 = sadd.s32 1, %s31
    $region7: #{tpu_custom_call.1} parent=1 // loop_footer_branch
      %30 = sbr.rel target = $region3
    $region8: #{tpu_custom_call.1} parent=1 // loop_exit
      _
    %1188 = vsyncpa [#allocation3], 1
    %s1189 = scalar_lea.sflag [#allocation3], 1
    %1190 = vsyncpa %s1189, 1
    %1191 = vsyncpa [#allocation8], 1
    %s1192 = scalar_lea.sflag [#allocation8], 1
    %1193 = vsyncpa %s1192, 1
    %1194 = vsyncpa [#allocation11], 1
    %1195 = vsyncpa [#allocation14], 1
    %1196 = vsyncpa [#allocation4], 1
    %s1197 = scalar_lea.sflag [#allocation4], 1
    %1198 = vsyncpa %s1197, 1
    %1199 = vsyncpa [#allocation17], 1
    %s1200 = scalar_lea.sflag [#allocation17], 1
    %1201 = vsyncpa %s1200, 1
    %1202 = vsyncpa [#allocation5], 1
    %s1203 = scalar_lea.sflag [#allocation5], 1
    %1204 = vsyncpa %s1203, 1

</llo_original>
